<compile_context>
chip_gen: v6e
topology: v6e:2x2x1
jax: 0.10.0
libtpu: 0.0.40
codegen_flags: <defaults>
</compile_context>

<pallas_src>
import functools

import jax
import jax.numpy as jnp
from jax.experimental import pallas as pl
from jax.experimental.pallas import tpu as pltpu

IN_F = 98    # network input features
OUT_F = 9    # network output features
PAD = 128    # lane-dense padded feature width used for all hidden layers
LAYER_DIMS = [(98, 120), (120, 60), (60, 30), (30, 9)]


def mlp_kernel(x_ref,
               w1_ref, b1_ref,
               w2_ref, b2_ref,
               w3_ref, b3_ref,
               w4_ref, b4_ref,
               o_ref,
               xpad_ref):
    # x_ref: (tb, 98) raw f32 batch tile.  Weights: (128, 128) bf16, resident in VMEM
    # across grid steps.  Biases: (1, 128) f32.  xpad_ref: (tb, 128) bf16 scratch.
    #
    # Widen x to a zero-padded 128-lane bf16 tile entirely inside VMEM.  Zero the whole
    # scratch every step (aligned full store, keeps pad lanes exactly 0 regardless of
    # how the grid is split across cores), then overwrite the real 98 lanes.
    xpad_ref[...] = jnp.zeros_like(xpad_ref)
    xpad_ref[:, :IN_F] = x_ref[...].astype(jnp.bfloat16)
    x = xpad_ref[...]

    # bf16 MXU matmuls with f32 accumulation; bias-add / ReLU in f32.
    h = jnp.dot(x, w1_ref[...], preferred_element_type=jnp.float32) + b1_ref[...]
    h = jnp.maximum(h, 0.0)
    # TODO(synk): nn.Dropout(p=0.2) is identity in eval mode; training-mode stochastic
    # dropout (pltpu.prng_seed / prng_random_bits) is not implemented.

    h = jnp.dot(h.astype(jnp.bfloat16), w2_ref[...],
                preferred_element_type=jnp.float32) + b2_ref[...]
    h = jnp.maximum(h, 0.0)

    h = jnp.dot(h.astype(jnp.bfloat16), w3_ref[...],
                preferred_element_type=jnp.float32) + b3_ref[...]
    h = jnp.maximum(h, 0.0)

    h = jnp.dot(h.astype(jnp.bfloat16), w4_ref[...],
                preferred_element_type=jnp.float32) + b4_ref[...]

    # Only the first OUT_F (=9) columns are real: write the narrow f32 block directly.
    o_ref[...] = h[:, :OUT_F].astype(o_ref.dtype)


def prepare_params(params):
    """One-time parameter prep: pad each W to (128,128) bf16, each b to (1,128) f32.

    Zero weight rows/cols + zero bias pads keep all padded lanes exactly 0 through
    every bias-add and ReLU, so the padded lanes never contaminate the real ones.
    """
    prepped = []
    for w, b in params:
        fin, fout = w.shape
        wp = jnp.zeros((PAD, PAD), jnp.bfloat16).at[:fin, :fout].set(
            w.astype(jnp.bfloat16))
        bp = jnp.zeros((1, PAD), jnp.float32).at[:, :fout].set(
            b.astype(jnp.float32))
        prepped.append((wp, bp))
    return tuple(prepped)


def _round_up(v, m):
    return ((v + m - 1) // m) * m


@functools.partial(jax.jit, static_argnames=("tb_max",))
def network_forward(x, prepared, *, tb_max=1024):
    """x: [batch, 98] f32 (raw, unpadded). prepared: prepare_params output.
    Returns [batch, 9] f32 (matches the PyTorch module in eval mode)."""
    (w1, b1), (w2, b2), (w3, b3), (w4, b4) = prepared
    batch = x.shape[0]

    # Tile choice: as large as possible (HBM/overhead-bound kernel) while keeping an
    # even grid of >= 2 steps when batch allows (both v7x TensorCores get work).
    # tb is a multiple of 8; Pallas clamps the trailing partial block (out-of-bounds
    # output rows are dropped), so neither batch padding nor an output slice is needed.
    pairs = pl.cdiv(batch, 2 * tb_max)
    tb = min(tb_max, max(8, _round_up(pl.cdiv(batch, 2 * pairs), 8)))
    grid = (pl.cdiv(batch, tb),)

    x_spec = pl.BlockSpec((tb, IN_F), lambda i: (i, 0))
    w_spec = pl.BlockSpec((PAD, PAD), lambda i: (0, 0))   # resident across grid steps
    b_spec = pl.BlockSpec((1, PAD), lambda i: (0, 0))     # resident across grid steps

    return pl.pallas_call(
        mlp_kernel,
        out_shape=jax.ShapeDtypeStruct((batch, OUT_F), jnp.float32),
        grid=grid,
        in_specs=[
            x_spec,
            w_spec, b_spec,
            w_spec, b_spec,
            w_spec, b_spec,
            w_spec, b_spec,
        ],
        out_specs=pl.BlockSpec((tb, OUT_F), lambda i: (i, 0)),
        scratch_shapes=[pltpu.VMEM((tb, PAD), jnp.bfloat16)],
        compiler_params=pltpu.CompilerParams(
            dimension_semantics=("parallel",),   # megacore sharding on v7x; no-op v5e/v6e
        ),
    )(x, w1, b1, w2, b2, w3, b3, w4, b4)


def init_params(key):
    # Deterministic init mirroring nn.Linear shapes:
    # Linear(98,120), Linear(120,60), Linear(60,30), Linear(30,9).
    params = []
    for (fin, fout) in LAYER_DIMS:
        kw, kb, key = jax.random.split(key, 3)
        bound = 1.0 / jnp.sqrt(fin)
        w = jax.random.uniform(kw, (fin, fout), jnp.float32, -bound, bound)
        b = jax.random.uniform(kb, (1, fout), jnp.float32, -bound, bound)
        params.append((w, b))
    return params


def reference_forward(x, params):
    # Pure-f32 reference matching the PyTorch module in eval mode.
    h = x
    for i, (w, b) in enumerate(params):
        h = h @ w + b
        if i < len(params) - 1:
            h = jnp.maximum(h, 0.0)
    return h


if __name__ == "__main__":
    key = jax.random.PRNGKey(0)
    kx, kp = jax.random.split(key)

    # batch=200 is deliberately not a multiple of the tile: exercises Pallas's
    # trailing partial-block handling (no host-side batch padding in the wrapper).
    batch = 200
    x = jax.random.normal(kx, (batch, IN_F), jnp.float32)
    params = init_params(kp)
    prepared = prepare_params(params)   # one-time weight/bias padding, hoisted out

    out = network_forward(x, prepared)
    out = jax.block_until_ready(out)

    ref = reference_forward(x, params)
    assert out.shape == (batch, OUT_F), out.shape
    # Tolerance loosened vs the f32 reference because matmul operands are bf16
    # (accumulation and the final output stay f32).
    assert jnp.allclose(out, ref, atol=3e-2, rtol=3e-2), "mismatch vs reference"

    print("KERNEL_OK")
</pallas_src>

<mosaic_0001>
module attributes {stable_mosaic.version = 11 : i64} {
  func.func @mlp_kernel(%arg0: i32, %arg1: memref<104x98xf32, #tpu.memory_space<vmem>>, %arg2: memref<128x128xbf16, #tpu.memory_space<vmem>>, %arg3: memref<1x128xf32, #tpu.memory_space<vmem>>, %arg4: memref<128x128xbf16, #tpu.memory_space<vmem>>, %arg5: memref<1x128xf32, #tpu.memory_space<vmem>>, %arg6: memref<128x128xbf16, #tpu.memory_space<vmem>>, %arg7: memref<1x128xf32, #tpu.memory_space<vmem>>, %arg8: memref<128x128xbf16, #tpu.memory_space<vmem>>, %arg9: memref<1x128xf32, #tpu.memory_space<vmem>>, %arg10: memref<104x9xf32, #tpu.memory_space<vmem>>, %arg11: memref<104x128xbf16, #tpu.memory_space<vmem>>) attributes {dimension_semantics = [#tpu.dimension_semantics<parallel>], iteration_bounds = array<i64: 2>, scalar_prefetch = 0 : i64, scratch_operands = 1 : i64, tpu.core_type = #tpu.core_type<tc>, window_params = [{transform_indices = @transform_0, window_bounds = array<i64: 104, 98>}, {pipeline_mode = #tpu.pipeline_mode<synchronous>, transform_indices = @transform_1, window_bounds = array<i64: 128, 128>}, {pipeline_mode = #tpu.pipeline_mode<synchronous>, transform_indices = @transform_2, window_bounds = array<i64: 1, 128>}, {pipeline_mode = #tpu.pipeline_mode<synchronous>, transform_indices = @transform_3, window_bounds = array<i64: 128, 128>}, {pipeline_mode = #tpu.pipeline_mode<synchronous>, transform_indices = @transform_4, window_bounds = array<i64: 1, 128>}, {pipeline_mode = #tpu.pipeline_mode<synchronous>, transform_indices = @transform_5, window_bounds = array<i64: 128, 128>}, {pipeline_mode = #tpu.pipeline_mode<synchronous>, transform_indices = @transform_6, window_bounds = array<i64: 1, 128>}, {pipeline_mode = #tpu.pipeline_mode<synchronous>, transform_indices = @transform_7, window_bounds = array<i64: 128, 128>}, {pipeline_mode = #tpu.pipeline_mode<synchronous>, transform_indices = @transform_8, window_bounds = array<i64: 1, 128>}, {transform_indices = @transform_9, window_bounds = array<i64: 104, 9>}]} {
    %cst = arith.constant 0.000000e+00 : bf16
    %0 = vector.broadcast %cst : bf16 to vector<104x128xbf16>
    %c0 = arith.constant 0 : index
    %c0_0 = arith.constant 0 : index
    %1 = vector.load %arg11[%c0, %c0_0] : memref<104x128xbf16, #tpu.memory_space<vmem>>, vector<104x128xbf16>
    tpu.vector_store %arg11[%c0, %c0_0], %0 {strides = array<i32>} : memref<104x128xbf16, #tpu.memory_space<vmem>>, vector<104x128xbf16>,
    %c0_1 = arith.constant 0 : index
    %c0_2 = arith.constant 0 : index
    %2 = vector.load %arg1[%c0_1, %c0_2] : memref<104x98xf32, #tpu.memory_space<vmem>>, vector<104x98xf32>
    %3 = arith.truncf %2 : vector<104x98xf32> to vector<104x98xbf16>
    %c0_3 = arith.constant 0 : index
    %c0_4 = arith.constant 0 : index
    %4 = vector.load %arg11[%c0_3, %c0_4] : memref<104x128xbf16, #tpu.memory_space<vmem>>, vector<104x98xbf16>
    tpu.vector_store %arg11[%c0_3, %c0_4], %3 {strides = array<i32>} : memref<104x128xbf16, #tpu.memory_space<vmem>>, vector<104x98xbf16>,
    %c0_5 = arith.constant 0 : index
    %c0_6 = arith.constant 0 : index
    %5 = vector.load %arg11[%c0_5, %c0_6] : memref<104x128xbf16, #tpu.memory_space<vmem>>, vector<104x128xbf16>
    %c0_7 = arith.constant 0 : index
    %c0_8 = arith.constant 0 : index
    %6 = vector.load %arg2[%c0_7, %c0_8] : memref<128x128xbf16, #tpu.memory_space<vmem>>, vector<128x128xbf16>
    %cst_9 = arith.constant dense<0.000000e+00> : vector<104x128xf32>
    %7 = tpu.matmul %5, %6, %cst_9 {dimension_numbers = #tpu.dot_dimension_numbers<[1], [0], [0], [1], [0, 0, 1, 1], [], []>} : vector<104x128xbf16>, vector<128x128xbf16>, vector<104x128xf32> -> vector<104x128xf32>
    %c0_10 = arith.constant 0 : index
    %c0_11 = arith.constant 0 : index
    %8 = vector.load %arg3[%c0_10, %c0_11] : memref<1x128xf32, #tpu.memory_space<vmem>>, vector<1x128xf32>
    %9 = vector.broadcast %8 : vector<1x128xf32> to vector<104x128xf32>
    %10 = arith.addf %7, %9 : vector<104x128xf32>
    %cst_12 = arith.constant 0.000000e+00 : f32
    %11 = vector.broadcast %cst_12 : f32 to vector<104x128xf32>
    %12 = arith.maximumf %10, %11 : vector<104x128xf32>
    %13 = arith.truncf %12 : vector<104x128xf32> to vector<104x128xbf16>
    %c0_13 = arith.constant 0 : index
    %c0_14 = arith.constant 0 : index
    %14 = vector.load %arg4[%c0_13, %c0_14] : memref<128x128xbf16, #tpu.memory_space<vmem>>, vector<128x128xbf16>
    %cst_15 = arith.constant dense<0.000000e+00> : vector<104x128xf32>
    %15 = tpu.matmul %13, %14, %cst_15 {dimension_numbers = #tpu.dot_dimension_numbers<[1], [0], [0], [1], [0, 0, 1, 1], [], []>} : vector<104x128xbf16>, vector<128x128xbf16>, vector<104x128xf32> -> vector<104x128xf32>
    %c0_16 = arith.constant 0 : index
    %c0_17 = arith.constant 0 : index
    %16 = vector.load %arg5[%c0_16, %c0_17] : memref<1x128xf32, #tpu.memory_space<vmem>>, vector<1x128xf32>
    %17 = vector.broadcast %16 : vector<1x128xf32> to vector<104x128xf32>
    %18 = arith.addf %15, %17 : vector<104x128xf32>
    %cst_18 = arith.constant 0.000000e+00 : f32
    %19 = vector.broadcast %cst_18 : f32 to vector<104x128xf32>
    %20 = arith.maximumf %18, %19 : vector<104x128xf32>
    %21 = arith.truncf %20 : vector<104x128xf32> to vector<104x128xbf16>
    %c0_19 = arith.constant 0 : index
    %c0_20 = arith.constant 0 : index
    %22 = vector.load %arg6[%c0_19, %c0_20] : memref<128x128xbf16, #tpu.memory_space<vmem>>, vector<128x128xbf16>
    %cst_21 = arith.constant dense<0.000000e+00> : vector<104x128xf32>
    %23 = tpu.matmul %21, %22, %cst_21 {dimension_numbers = #tpu.dot_dimension_numbers<[1], [0], [0], [1], [0, 0, 1, 1], [], []>} : vector<104x128xbf16>, vector<128x128xbf16>, vector<104x128xf32> -> vector<104x128xf32>
    %c0_22 = arith.constant 0 : index
    %c0_23 = arith.constant 0 : index
    %24 = vector.load %arg7[%c0_22, %c0_23] : memref<1x128xf32, #tpu.memory_space<vmem>>, vector<1x128xf32>
    %25 = vector.broadcast %24 : vector<1x128xf32> to vector<104x128xf32>
    %26 = arith.addf %23, %25 : vector<104x128xf32>
    %cst_24 = arith.constant 0.000000e+00 : f32
    %27 = vector.broadcast %cst_24 : f32 to vector<104x128xf32>
    %28 = arith.maximumf %26, %27 : vector<104x128xf32>
    %29 = arith.truncf %28 : vector<104x128xf32> to vector<104x128xbf16>
    %c0_25 = arith.constant 0 : index
    %c0_26 = arith.constant 0 : index
    %30 = vector.load %arg8[%c0_25, %c0_26] : memref<128x128xbf16, #tpu.memory_space<vmem>>, vector<128x128xbf16>
    %cst_27 = arith.constant dense<0.000000e+00> : vector<104x128xf32>
    %31 = tpu.matmul %29, %30, %cst_27 {dimension_numbers = #tpu.dot_dimension_numbers<[1], [0], [0], [1], [0, 0, 1, 1], [], []>} : vector<104x128xbf16>, vector<128x128xbf16>, vector<104x128xf32> -> vector<104x128xf32>
    %c0_28 = arith.constant 0 : index
    %c0_29 = arith.constant 0 : index
    %32 = vector.load %arg9[%c0_28, %c0_29] : memref<1x128xf32, #tpu.memory_space<vmem>>, vector<1x128xf32>
    %33 = vector.broadcast %32 : vector<1x128xf32> to vector<104x128xf32>
    %34 = arith.addf %31, %33 : vector<104x128xf32>
    %35 = vector.extract_strided_slice %34 {offsets = [0, 0], sizes = [104, 9], strides = [1, 1]} : vector<104x128xf32> to vector<104x9xf32>
    %c0_30 = arith.constant 0 : index
    %c0_31 = arith.constant 0 : index
    %36 = vector.load %arg10[%c0_30, %c0_31] : memref<104x9xf32, #tpu.memory_space<vmem>>, vector<104x9xf32>
    tpu.vector_store %arg10[%c0_30, %c0_31], %35 {strides = array<i32>} : memref<104x9xf32, #tpu.memory_space<vmem>>, vector<104x9xf32>,
    return
  }
  func.func @transform_0(%arg0: i32) -> (i32, i32) {
    %c0_i32 = arith.constant 0 : i32
    %c0_i32_0 = arith.constant 0 : i32
    return %arg0, %c0_i32 : i32, i32
  }
  func.func @transform_1(%arg0: i32) -> (i32, i32) {
    %c0_i32 = arith.constant 0 : i32
    %c0_i32_0 = arith.constant 0 : i32
    %c0_i32_1 = arith.constant 0 : i32
    return %c0_i32, %c0_i32_0 : i32, i32
  }
  func.func @transform_2(%arg0: i32) -> (i32, i32) {
    %c0_i32 = arith.constant 0 : i32
    %c0_i32_0 = arith.constant 0 : i32
    %c0_i32_1 = arith.constant 0 : i32
    return %c0_i32, %c0_i32_0 : i32, i32
  }
  func.func @transform_3(%arg0: i32) -> (i32, i32) {
    %c0_i32 = arith.constant 0 : i32
    %c0_i32_0 = arith.constant 0 : i32
    %c0_i32_1 = arith.constant 0 : i32
    return %c0_i32, %c0_i32_0 : i32, i32
  }
  func.func @transform_4(%arg0: i32) -> (i32, i32) {
    %c0_i32 = arith.constant 0 : i32
    %c0_i32_0 = arith.constant 0 : i32
    %c0_i32_1 = arith.constant 0 : i32
    return %c0_i32, %c0_i32_0 : i32, i32
  }
  func.func @transform_5(%arg0: i32) -> (i32, i32) {
    %c0_i32 = arith.constant 0 : i32
    %c0_i32_0 = arith.constant 0 : i32
    %c0_i32_1 = arith.constant 0 : i32
    return %c0_i32, %c0_i32_0 : i32, i32
  }
  func.func @transform_6(%arg0: i32) -> (i32, i32) {
    %c0_i32 = arith.constant 0 : i32
    %c0_i32_0 = arith.constant 0 : i32
    %c0_i32_1 = arith.constant 0 : i32
    return %c0_i32, %c0_i32_0 : i32, i32
  }
  func.func @transform_7(%arg0: i32) -> (i32, i32) {
    %c0_i32 = arith.constant 0 : i32
    %c0_i32_0 = arith.constant 0 : i32
    %c0_i32_1 = arith.constant 0 : i32
    return %c0_i32, %c0_i32_0 : i32, i32
  }
  func.func @transform_8(%arg0: i32) -> (i32, i32) {
    %c0_i32 = arith.constant 0 : i32
    %c0_i32_0 = arith.constant 0 : i32
    %c0_i32_1 = arith.constant 0 : i32
    return %c0_i32, %c0_i32_0 : i32, i32
  }
  func.func @transform_9(%arg0: i32) -> (i32, i32) {
    %c0_i32 = arith.constant 0 : i32
    %c0_i32_0 = arith.constant 0 : i32
    return %arg0, %c0_i32 : i32, i32
  }
}

</mosaic_0001>

<llo_original>
// kernel: network_forward.1
$region0: #{network_forward.1}
  #allocation0 [shape = 'u32[]', space=smem, size = 0x4, offset = 0x4, fixed_abs, tag = 'smem constant byte address 0x4 - core index']
  #allocation1 [shape = 'u32[144,128]{1,0:T(1,128)}', space=vmem, size = 0x12000, scoped, tag = 'internal scratch']
  #allocation2 [shape = 'bf16[104,128]{1,0:T(8,128)(2,1)}', space=vmem, size = 0x6800, scoped, tag = 'scratch operand']
  %s0 = inlined_call_operand.hbm [shape: f32[200,98], index: 0, kind: input, shape index: {}]
  %s1 = inlined_call_operand.hbm [shape: bf16[128,128], index: 1, kind: input, shape index: {}]
  %s2 = inlined_call_operand.vmem [shape: f32[1,128], index: 2, kind: input, shape index: {}]
  %s3 = inlined_call_operand.hbm [shape: bf16[128,128], index: 3, kind: input, shape index: {}]
  %s4 = inlined_call_operand.vmem [shape: f32[1,128], index: 4, kind: input, shape index: {}]
  %s5 = inlined_call_operand.hbm [shape: bf16[128,128], index: 5, kind: input, shape index: {}]
  %s6 = inlined_call_operand.vmem [shape: f32[1,128], index: 6, kind: input, shape index: {}]
  %s7 = inlined_call_operand.hbm [shape: bf16[128,128], index: 7, kind: input, shape index: {}]
  %s8 = inlined_call_operand.vmem [shape: f32[1,128], index: 8, kind: input, shape index: {}]
  %s9 = inlined_call_operand.vmem [shape: f32[200,9], index: 9, kind: output, shape index: {}]
  %s10 = sld [smem:[#allocation0]]
  $region137: #{network_forward.1} parent=0
    _
  %s12 = ssub.s32 1, %s10
  %s13 = scalar_select 0, %s12, %s10
  $region1: #{network_forward.1} parent=0
    #allocation3 [shape = 'u8[106496]{0}', space=vmem, size = 0x1a000, scoped, tag = 'input window, operand 0']
    #allocation4 [shape = 's32[2]{0}', space=sflag, size = 0x8, scoped, tag = 'scoped memory for network_forward.1']
    #allocation5 [shape = 'u8[32768]{0}', space=vmem, size = 0x8000, scoped, tag = 'input window, operand 1, single buffered']
    #allocation6 [shape = 's32[1]{0}', space=sflag, size = 0x4, scoped, tag = 'scoped memory for network_forward.1']
    #allocation7 [shape = 'u8[32768]{0}', space=vmem, size = 0x8000, scoped, tag = 'input window, operand 3, single buffered']
    #allocation8 [shape = 'u8[32768]{0}', space=vmem, size = 0x8000, scoped, tag = 'input window, operand 5, single buffered']
    #allocation9 [shape = 's32[1]{0}', space=sflag, size = 0x4, scoped, tag = 'scoped memory for network_forward.1']
    #allocation10 [shape = 'u8[32768]{0}', space=vmem, size = 0x8000, scoped, tag = 'input window, operand 7, single buffered']
    #allocation11 [shape = 'u8[106496]{0}', space=vmem, size = 0x1a000, scoped, tag = 'output window, operand 0']
    %14 = vsyncpa [#allocation4], 0
    %s15 = scalar_lea.sflag [#allocation4], 1
    %16 = vsyncpa %s15, 0
    %17 = vsyncpa [#allocation6], 0
    %18 = vsyncpa [#allocation9], 0
    loop: start=0, step=1, limit=4
    $region2: #{network_forward.1} parent=1 // loop_pre_header
      _
    $region3: #{network_forward.1} parent=1 // loop_header
      %s20 = sphi 0, %s24
      %p21 = scmp.ge.s32.totalorder %s20, 4
      %s30 = sphi 0, %s32
      %s33 = sphi 0, %s30
      %s34 = sphi 0, %s33
      %s50 = sphi 0, %s34
      %s54 = sphi 0, %s54
      %s56 = sphi 0, %s54
      %s57 = sphi 0, %s56
      %s71 = sphi 0, %s57
      %s75 = sphi 0, %s75
      %s77 = sphi 0, %s75
      %s78 = sphi 0, %s77
      %s92 = sphi 0, %s78
      %s96 = sphi 0, %s96
      %s98 = sphi 0, %s96
      %s99 = sphi 0, %s98
      %s113 = sphi 0, %s99
      %s117 = sphi 0, %s117
      %s119 = sphi 0, %s117
      %s120 = sphi 0, %s119
      %s134 = sphi 0, %s120
      %s138 = sphi 0, %s138
      %s140 = sphi 0, %s138
      %s141 = sphi 0, %s140
      %s155 = sphi 0, %s141
      %s159 = sphi 0, %s159
      %s161 = sphi 0, %s159
      %s162 = sphi 0, %s161
      %s176 = sphi 0, %s162
      %s180 = sphi 0, %s180
      %s182 = sphi 0, %s180
      %s183 = sphi 0, %s182
      %s197 = sphi 0, %s183
      %s201 = sphi 0, %s201
      %s203 = sphi 0, %s201
      %s204 = sphi 0, %s203
      %s218 = sphi 0, %s204
      %s224 = sphi 0, %s226
      %s227 = sphi 0, %s224
      %s228 = sphi 0, %s227
      %s244 = sphi 0, %s228
    $region4: #{network_forward.1} parent=1 // loop_header_branch
      %23 = sbr.rel (%p21) target = $region8
    $region5: #{network_forward.1} parent=1 // loop_body
      %s25 = ssub.s32 %s20, 1
      %s26 = ssub.s32 %s20, 2
      %s27 = sadd.s32 %s20, 1
      %s28 = ssub.s32 %s20, %s27
      %p29 = scmp.eq.s32.totalorder %s28, 0
      %s31 = sadd.s32 %s30, 1
      %s32 = scalar_select %p29, %s30, %s31
      %p35 = pneg %p29
      %p36 = scmp.eq.s32.totalorder %s20, 1
      %p37 = por %p35, %p36
      %p38 = scmp.ne.s32.totalorder %s30, %s33
      %p39 = scmp.eq.s32.totalorder %s20, 0
      %p40 = por %p38, %p39
      %p41 = scmp.ne.s32.totalorder %s30, %s33
      %p42 = scmp.eq.s32.totalorder %s25, 1
      %p43 = por %p41, %p42
      %p44 = scmp.ne.s32.totalorder %s33, %s34
      %p45 = scmp.eq.s32.totalorder %s25, 0
      %p46 = por %p44, %p45
      %p47 = scmp.ne.s32.totalorder %s33, %s34
      %p48 = scmp.eq.s32.totalorder %s26, 1
      %p49 = por %p47, %p48
      %p51 = scmp.ne.s32.totalorder %s34, %s50
      %p52 = scmp.eq.s32.totalorder %s26, 0
      %p53 = por %p51, %p52
      %s55 = sadd.s32 %s54, 1
      %p58 = scmp.eq.s32.totalorder %s20, 1
      %p59 = scmp.ne.s32.totalorder %s54, %s56
      %p60 = scmp.eq.s32.totalorder %s20, 0
      %p61 = por %p59, %p60
      %p62 = scmp.ne.s32.totalorder %s54, %s56
      %p63 = scmp.eq.s32.totalorder %s25, 1
      %p64 = por %p62, %p63
      %p65 = scmp.ne.s32.totalorder %s56, %s57
      %p66 = scmp.eq.s32.totalorder %s25, 0
      %p67 = por %p65, %p66
      %p68 = scmp.ne.s32.totalorder %s56, %s57
      %p69 = scmp.eq.s32.totalorder %s26, 1
      %p70 = por %p68, %p69
      %p72 = scmp.ne.s32.totalorder %s57, %s71
      %p73 = scmp.eq.s32.totalorder %s26, 0
      %p74 = por %p72, %p73
      %s76 = sadd.s32 %s75, 1
      %p79 = scmp.eq.s32.totalorder %s20, 1
      %p80 = scmp.ne.s32.totalorder %s75, %s77
      %p81 = scmp.eq.s32.totalorder %s20, 0
      %p82 = por %p80, %p81
      %p83 = scmp.ne.s32.totalorder %s75, %s77
      %p84 = scmp.eq.s32.totalorder %s25, 1
      %p85 = por %p83, %p84
      %p86 = scmp.ne.s32.totalorder %s77, %s78
      %p87 = scmp.eq.s32.totalorder %s25, 0
      %p88 = por %p86, %p87
      %p89 = scmp.ne.s32.totalorder %s77, %s78
      %p90 = scmp.eq.s32.totalorder %s26, 1
      %p91 = por %p89, %p90
      %p93 = scmp.ne.s32.totalorder %s78, %s92
      %p94 = scmp.eq.s32.totalorder %s26, 0
      %p95 = por %p93, %p94
      %s97 = sadd.s32 %s96, 1
      %p100 = scmp.eq.s32.totalorder %s20, 1
      %p101 = scmp.ne.s32.totalorder %s96, %s98
      %p102 = scmp.eq.s32.totalorder %s20, 0
      %p103 = por %p101, %p102
      %p104 = scmp.ne.s32.totalorder %s96, %s98
      %p105 = scmp.eq.s32.totalorder %s25, 1
      %p106 = por %p104, %p105
      %p107 = scmp.ne.s32.totalorder %s98, %s99
      %p108 = scmp.eq.s32.totalorder %s25, 0
      %p109 = por %p107, %p108
      %p110 = scmp.ne.s32.totalorder %s98, %s99
      %p111 = scmp.eq.s32.totalorder %s26, 1
      %p112 = por %p110, %p111
      %p114 = scmp.ne.s32.totalorder %s99, %s113
      %p115 = scmp.eq.s32.totalorder %s26, 0
      %p116 = por %p114, %p115
      %s118 = sadd.s32 %s117, 1
      %p121 = scmp.eq.s32.totalorder %s20, 1
      %p122 = scmp.ne.s32.totalorder %s117, %s119
      %p123 = scmp.eq.s32.totalorder %s20, 0
      %p124 = por %p122, %p123
      %p125 = scmp.ne.s32.totalorder %s117, %s119
      %p126 = scmp.eq.s32.totalorder %s25, 1
      %p127 = por %p125, %p126
      %p128 = scmp.ne.s32.totalorder %s119, %s120
      %p129 = scmp.eq.s32.totalorder %s25, 0
      %p130 = por %p128, %p129
      %p131 = scmp.ne.s32.totalorder %s119, %s120
      %p132 = scmp.eq.s32.totalorder %s26, 1
      %p133 = por %p131, %p132
      %p135 = scmp.ne.s32.totalorder %s120, %s134
      %p136 = scmp.eq.s32.totalorder %s26, 0
      %p137 = por %p135, %p136
      %s139 = sadd.s32 %s138, 1
      %p142 = scmp.eq.s32.totalorder %s20, 1
      %p143 = scmp.ne.s32.totalorder %s138, %s140
      %p144 = scmp.eq.s32.totalorder %s20, 0
      %p145 = por %p143, %p144
      %p146 = scmp.ne.s32.totalorder %s138, %s140
      %p147 = scmp.eq.s32.totalorder %s25, 1
      %p148 = por %p146, %p147
      %p149 = scmp.ne.s32.totalorder %s140, %s141
      %p150 = scmp.eq.s32.totalorder %s25, 0
      %p151 = por %p149, %p150
      %p152 = scmp.ne.s32.totalorder %s140, %s141
      %p153 = scmp.eq.s32.totalorder %s26, 1
      %p154 = por %p152, %p153
      %p156 = scmp.ne.s32.totalorder %s141, %s155
      %p157 = scmp.eq.s32.totalorder %s26, 0
      %p158 = por %p156, %p157
      %s160 = sadd.s32 %s159, 1
      %p163 = scmp.eq.s32.totalorder %s20, 1
      %p164 = scmp.ne.s32.totalorder %s159, %s161
      %p165 = scmp.eq.s32.totalorder %s20, 0
      %p166 = por %p164, %p165
      %p167 = scmp.ne.s32.totalorder %s159, %s161
      %p168 = scmp.eq.s32.totalorder %s25, 1
      %p169 = por %p167, %p168
      %p170 = scmp.ne.s32.totalorder %s161, %s162
      %p171 = scmp.eq.s32.totalorder %s25, 0
      %p172 = por %p170, %p171
      %p173 = scmp.ne.s32.totalorder %s161, %s162
      %p174 = scmp.eq.s32.totalorder %s26, 1
      %p175 = por %p173, %p174
      %p177 = scmp.ne.s32.totalorder %s162, %s176
      %p178 = scmp.eq.s32.totalorder %s26, 0
      %p179 = por %p177, %p178
      %s181 = sadd.s32 %s180, 1
      %p184 = scmp.eq.s32.totalorder %s20, 1
      %p185 = scmp.ne.s32.totalorder %s180, %s182
      %p186 = scmp.eq.s32.totalorder %s20, 0
      %p187 = por %p185, %p186
      %p188 = scmp.ne.s32.totalorder %s180, %s182
      %p189 = scmp.eq.s32.totalorder %s25, 1
      %p190 = por %p188, %p189
      %p191 = scmp.ne.s32.totalorder %s182, %s183
      %p192 = scmp.eq.s32.totalorder %s25, 0
      %p193 = por %p191, %p192
      %p194 = scmp.ne.s32.totalorder %s182, %s183
      %p195 = scmp.eq.s32.totalorder %s26, 1
      %p196 = por %p194, %p195
      %p198 = scmp.ne.s32.totalorder %s183, %s197
      %p199 = scmp.eq.s32.totalorder %s26, 0
      %p200 = por %p198, %p199
      %s202 = sadd.s32 %s201, 1
      %p205 = scmp.eq.s32.totalorder %s20, 1
      %p206 = scmp.ne.s32.totalorder %s201, %s203
      %p207 = scmp.eq.s32.totalorder %s20, 0
      %p208 = por %p206, %p207
      %p209 = scmp.ne.s32.totalorder %s201, %s203
      %p210 = scmp.eq.s32.totalorder %s25, 1
      %p211 = por %p209, %p210
      %p212 = scmp.ne.s32.totalorder %s203, %s204
      %p213 = scmp.eq.s32.totalorder %s25, 0
      %p214 = por %p212, %p213
      %p215 = scmp.ne.s32.totalorder %s203, %s204
      %p216 = scmp.eq.s32.totalorder %s26, 1
      %p217 = por %p215, %p216
      %p219 = scmp.ne.s32.totalorder %s204, %s218
      %p220 = scmp.eq.s32.totalorder %s26, 0
      %p221 = por %p219, %p220
      %s222 = ssub.s32 %s20, %s27
      %p223 = scmp.eq.s32.totalorder %s222, 0
      %s225 = sadd.s32 %s224, 1
      %s226 = scalar_select %p223, %s224, %s225
      %p229 = pneg %p223
      %p230 = scmp.eq.s32.totalorder %s20, 1
      %p231 = por %p229, %p230
      %p232 = scmp.ne.s32.totalorder %s224, %s227
      %p233 = scmp.eq.s32.totalorder %s20, 0
      %p234 = por %p232, %p233
      %p235 = scmp.ne.s32.totalorder %s224, %s227
      %p236 = scmp.eq.s32.totalorder %s25, 1
      %p237 = por %p235, %p236
      %p238 = scmp.ne.s32.totalorder %s227, %s228
      %p239 = scmp.eq.s32.totalorder %s25, 0
      %p240 = por %p238, %p239
      %p241 = scmp.ne.s32.totalorder %s227, %s228
      %p242 = scmp.eq.s32.totalorder %s26, 1
      %p243 = por %p241, %p242
      %p245 = scmp.ne.s32.totalorder %s228, %s244
      %p246 = scmp.eq.s32.totalorder %s26, 0
      %p247 = por %p245, %p246
      %p248 = scmp.le.s32.totalorder 1, %s20
      %p249 = scmp.lt.s32.totalorder %s20, 3
      %p250 = pnand %p248, %p249
      %p251 = pneg %p250
      // Predicated region
      $region9: #{network_forward.1} parent=5 // pred_check
        _
      $region10: #{network_forward.1} parent=5 // pred_check_branch
        %253 = sbr.rel (%p250) target = $region12
      $region11: #{network_forward.1} parent=5 // pred_region
        %s254 = ssub.s32 %s20, 1
        // Predicated region
        $region13: #{network_forward.1} parent=11 // pred_check
          %p255 = pneg %p67
        $region14: #{network_forward.1} parent=11 // pred_check_branch
          %257 = sbr.rel (%p255) target = $region16
        $region15: #{network_forward.1} parent=11 // pred_region
          %s259 = ssub.s32 1024, 1024
          %260 = vsyncadd [#allocation6], %s259
          %s261 = sshll.u32 [#allocation5], 4
          %s262 = int_to_ptr.vmem [resolvable:$true] %s261
          %267 = dma.hbm_to_vmem [thread:$0]  %s1, 1024, %s262, [#allocation6], 64, 64, 4
        $region16: #{network_forward.1} parent=11 // pred_fallthru
          _
        // Predicated region
        $region17: #{network_forward.1} parent=11 // pred_check
          %p268 = pneg %p88
        $region18: #{network_forward.1} parent=11 // pred_check_branch
          %270 = sbr.rel (%p268) target = $region20
        $region19: #{network_forward.1} parent=11 // pred_region
          _
        $region20: #{network_forward.1} parent=11 // pred_fallthru
          _
        // Predicated region
        $region21: #{network_forward.1} parent=11 // pred_check
          %p271 = pneg %p109
        $region22: #{network_forward.1} parent=11 // pred_check_branch
          %273 = sbr.rel (%p271) target = $region24
        $region23: #{network_forward.1} parent=11 // pred_region
          %s275 = ssub.s32 1024, 1024
          %276 = vsyncadd [#allocation6], %s275
          %s277 = sshll.u32 [#allocation7], 4
          %s278 = int_to_ptr.vmem [resolvable:$true] %s277
          %283 = dma.hbm_to_vmem [thread:$0]  %s3, 1024, %s278, [#allocation6], 64, 64, 4
        $region24: #{network_forward.1} parent=11 // pred_fallthru
          _
        // Predicated region
        $region25: #{network_forward.1} parent=11 // pred_check
          %p284 = pneg %p130
        $region26: #{network_forward.1} parent=11 // pred_check_branch
          %286 = sbr.rel (%p284) target = $region28
        $region27: #{network_forward.1} parent=11 // pred_region
          _
        $region28: #{network_forward.1} parent=11 // pred_fallthru
          _
        // Predicated region
        $region29: #{network_forward.1} parent=11 // pred_check
          %p287 = pneg %p151
        $region30: #{network_forward.1} parent=11 // pred_check_branch
          %289 = sbr.rel (%p287) target = $region32
        $region31: #{network_forward.1} parent=11 // pred_region
          %s291 = ssub.s32 1024, 1024
          %292 = vsyncadd [#allocation9], %s291
          %s293 = sshll.u32 [#allocation8], 4
          %s294 = int_to_ptr.vmem [resolvable:$true] %s293
          %299 = dma.hbm_to_vmem [thread:$0]  %s5, 1024, %s294, [#allocation9], 64, 64, 4
        $region32: #{network_forward.1} parent=11 // pred_fallthru
          _
        // Predicated region
        $region33: #{network_forward.1} parent=11 // pred_check
          %p300 = pneg %p172
        $region34: #{network_forward.1} parent=11 // pred_check_branch
          %302 = sbr.rel (%p300) target = $region36
        $region35: #{network_forward.1} parent=11 // pred_region
          _
        $region36: #{network_forward.1} parent=11 // pred_fallthru
          _
        // Predicated region
        $region37: #{network_forward.1} parent=11 // pred_check
          %p303 = pneg %p193
        $region38: #{network_forward.1} parent=11 // pred_check_branch
          %305 = sbr.rel (%p303) target = $region40
        $region39: #{network_forward.1} parent=11 // pred_region
          %s307 = ssub.s32 1024, 1024
          %308 = vsyncadd [#allocation9], %s307
          %s309 = sshll.u32 [#allocation10], 4
          %s310 = int_to_ptr.vmem [resolvable:$true] %s309
          %315 = dma.hbm_to_vmem [thread:$0]  %s7, 1024, %s310, [#allocation9], 64, 64, 4
        $region40: #{network_forward.1} parent=11 // pred_fallthru
          _
        // Predicated region
        $region41: #{network_forward.1} parent=11 // pred_check
          %p316 = pneg %p214
        $region42: #{network_forward.1} parent=11 // pred_check_branch
          %318 = sbr.rel (%p316) target = $region44
        $region43: #{network_forward.1} parent=11 // pred_region
          _
        $region44: #{network_forward.1} parent=11 // pred_fallthru
          _
      $region12: #{network_forward.1} parent=5 // pred_fallthru
        _
      %p319 = scmp.lt.s32.totalorder %s20, 2
      // Predicated region
      $region45: #{network_forward.1} parent=5 // pred_check
        %p320 = pneg %p319
      $region46: #{network_forward.1} parent=5 // pred_check_branch
        %322 = sbr.rel (%p320) target = $region48
      $region47: #{network_forward.1} parent=5 // pred_region
        // Predicated region
        $region49: #{network_forward.1} parent=47 // pred_check
          %p323 = pneg %p40
        $region50: #{network_forward.1} parent=47 // pred_check_branch
          %325 = sbr.rel (%p323) target = $region52
        $region51: #{network_forward.1} parent=47 // pred_region
          %s326 = sand.u32 %s30, 1
          %s327 = scalar_lea.sflag [#allocation4], %s326
          %s328 = sand.u32 %s30, 1
          %s329 = smul.addr %s328, 104
          %s330 = scalar_lea.vmem [#allocation3], %s329
          %s331 = smul.u32 13, %s20
          %s332 = ssub.s32 25, %s331
          %p333 = scmp.lt.s32.totalorder %s332, 13
          %s334 = scalar_select %p333, %s332, 13
          %s335 = smul.u32 128, %s334
          %s337 = ssub.s32 1664, %s335
          %338 = vsyncadd %s327, %s337
          %p339 = scmp.ne.s32.totalorder 0, %s335
          %s340 = smul.addr %s331, 128
          %s341 = scalar_lea.hbm %s0, %s340
          %s342 = smul.u32 8, %s334
          %s343 = sshll.u32 %s330, 4
          %s344 = int_to_ptr.vmem [resolvable:$true] %s343
          %s345 = sshll.u32 %s342, 4
          %349 = dma.hbm_to_vmem [thread:$0]  (%p339), %s341, %s345, %s344, %s327, 128, 128, 8
        $region52: #{network_forward.1} parent=47 // pred_fallthru
          _
      $region48: #{network_forward.1} parent=5 // pred_fallthru
        _
      %p350 = scmp.le.s32.totalorder 1, %s20
      %p351 = scmp.lt.s32.totalorder %s20, 3
      %p352 = pnand %p350, %p351
      %p353 = pneg %p352
      // Predicated region
      $region53: #{network_forward.1} parent=5 // pred_check
        _
      $region54: #{network_forward.1} parent=5 // pred_check_branch
        %355 = sbr.rel (%p352) target = $region56
      $region55: #{network_forward.1} parent=5 // pred_region
        %s356 = ssub.s32 %s20, 1
        %s357 = sand.u32 %s33, 1
        %s358 = scalar_lea.sflag [#allocation4], %s357
        %s359 = sand.u32 %s33, 1
        %s360 = smul.addr %s359, 104
        %s361 = scalar_lea.vmem [#allocation3], %s360
        // Predicated region
        $region57: #{network_forward.1} parent=55 // pred_check
          %p362 = pneg %p46
        $region58: #{network_forward.1} parent=55 // pred_check_branch
          %364 = sbr.rel (%p362) target = $region60
        $region59: #{network_forward.1} parent=55 // pred_region
          %365 = dma.done %s358, 1664
        $region60: #{network_forward.1} parent=55 // pred_fallthru
          _
        // Predicated region
        $region61: #{network_forward.1} parent=55 // pred_check
          %p366 = pneg %p67
        $region62: #{network_forward.1} parent=55 // pred_check_branch
          %368 = sbr.rel (%p366) target = $region64
        $region63: #{network_forward.1} parent=55 // pred_region
          %369 = dma.done [#allocation6], 1024
        $region64: #{network_forward.1} parent=55 // pred_fallthru
          _
        // Predicated region
        $region65: #{network_forward.1} parent=55 // pred_check
          %p370 = pneg %p109
        $region66: #{network_forward.1} parent=55 // pred_check_branch
          %372 = sbr.rel (%p370) target = $region68
        $region67: #{network_forward.1} parent=55 // pred_region
          %373 = dma.done [#allocation6], 1024
        $region68: #{network_forward.1} parent=55 // pred_fallthru
          _
        // Predicated region
        $region69: #{network_forward.1} parent=55 // pred_check
          %p374 = pneg %p151
        $region70: #{network_forward.1} parent=55 // pred_check_branch
          %376 = sbr.rel (%p374) target = $region72
        $region71: #{network_forward.1} parent=55 // pred_region
          %377 = dma.done [#allocation9], 1024
        $region72: #{network_forward.1} parent=55 // pred_fallthru
          _
        // Predicated region
        $region73: #{network_forward.1} parent=55 // pred_check
          %p378 = pneg %p193
        $region74: #{network_forward.1} parent=55 // pred_check_branch
          %380 = sbr.rel (%p378) target = $region76
        $region75: #{network_forward.1} parent=55 // pred_region
          %381 = dma.done [#allocation9], 1024
        $region76: #{network_forward.1} parent=55 // pred_fallthru
          _
        %s382 = sand.u32 %s33, 1
        %s383 = scalar_lea.sflag [#allocation4], %s382
        %s384 = sand.u32 %s33, 1
        %s385 = smul.addr %s384, 104
        %s386 = scalar_lea.vmem [#allocation3], %s385
        %p387 = pneg %p46
        %p388 = pneg %p43
        %p389 = pneg %p67
        %p390 = pneg %p64
        %p391 = pneg %p88
        %p392 = pneg %p85
        %p393 = pneg %p109
        %p394 = pneg %p106
        %p395 = pneg %p130
        %p396 = pneg %p127
        %p397 = pneg %p151
        %p398 = pneg %p148
        %p399 = pneg %p172
        %p400 = pneg %p169
        %p401 = pneg %p193
        %p402 = pneg %p190
        %p403 = pneg %p214
        %p404 = pneg %p211
        %p405 = pneg %p240
        %p406 = pneg %p237
        %s407 = sand.u32 %s227, 1
        %s408 = sand.u32 %s227, 1
        %s409 = smul.addr %s408, 104
        %s410 = scalar_lea.vmem [#allocation11], %s409
        %s411 = smul.u32 13, %s25
        %s412 = ssub.s32 25, %s411
        %p413 = scmp.lt.s32.totalorder %s412, 13
        %s414 = scalar_select %p413, %s412, 13
        %s415 = smul.u32 128, %s414
        %s416 = smul.u32 13, %s25
        %s417 = ssub.s32 25, %s416
        %p418 = scmp.lt.s32.totalorder %s417, 13
        %s419 = scalar_select %p418, %s417, 13
        %s420 = smul.u32 128, %s419
        %422 = vst [vmem:[#allocation2] sm:$0xf] 0
        %423 = vst [vmem:[#allocation2 + $0x4] sm:$0xf] 0
        %424 = vst [vmem:[#allocation2 + $0x8] sm:$0xf] 0
        %425 = vst [vmem:[#allocation2 + $0xc] sm:$0xf] 0
        %426 = vst [vmem:[#allocation2 + $0x10] sm:$0xf] 0
        %427 = vst [vmem:[#allocation2 + $0x14] sm:$0xf] 0
        %428 = vst [vmem:[#allocation2 + $0x18] sm:$0xf] 0
        %429 = vst [vmem:[#allocation2 + $0x1c] sm:$0xf] 0
        %430 = vst [vmem:[#allocation2 + $0x20] sm:$0xf] 0
        %431 = vst [vmem:[#allocation2 + $0x24] sm:$0xf] 0
        %432 = vst [vmem:[#allocation2 + $0x28] sm:$0xf] 0
        %433 = vst [vmem:[#allocation2 + $0x2c] sm:$0xf] 0
        %434 = vst [vmem:[#allocation2 + $0x30] sm:$0xf] 0
        %v435 = vld [vmem:[%s361] sm:$0xff]
        %v436 = vld [vmem:[%s361 + $0x8] sm:$0xff]
        %v437 = vld [vmem:[%s361 + $0x10] sm:$0xff]
        %v438 = vld [vmem:[%s361 + $0x18] sm:$0xff]
        %v439 = vld [vmem:[%s361 + $0x20] sm:$0xff]
        %v440 = vld [vmem:[%s361 + $0x28] sm:$0xff]
        %v441 = vld [vmem:[%s361 + $0x30] sm:$0xff]
        %v442 = vld [vmem:[%s361 + $0x38] sm:$0xff]
        %v443 = vld [vmem:[%s361 + $0x40] sm:$0xff]
        %v444 = vld [vmem:[%s361 + $0x48] sm:$0xff]
        %v445 = vld [vmem:[%s361 + $0x50] sm:$0xff]
        %v446 = vld [vmem:[%s361 + $0x58] sm:$0xff]
        %v447 = vld [vmem:[%s361 + $0x60] sm:$0xff]
        %v448 = vpack.c.bf16 %v436, %v435
        %v449 = vpack.c.bf16 %v438, %v437
        %v450 = vpack.c.bf16 %v440, %v439
        %v451 = vpack.c.bf16 %v442, %v441
        %v452 = vpack.c.bf16 %v444, %v443
        %v453 = vpack.c.bf16 %v446, %v445
        %v454 = vpack.c.bf16 %v447, %v447
        %v462 = vunpack.c.l.b16 %v448
        %v463 = vunpack.c.h.b16 %v448
        %v464 = vunpack.c.l.b16 %v449
        %v465 = vunpack.c.h.b16 %v449
        %v466 = vunpack.c.l.b16 %v450
        %v467 = vunpack.c.h.b16 %v450
        %v468 = vunpack.c.l.b16 %v451
        %v469 = vunpack.c.h.b16 %v451
        %v470 = vunpack.c.l.b16 %v452
        %v471 = vunpack.c.h.b16 %v452
        %v472 = vunpack.c.l.b16 %v453
        %v473 = vunpack.c.h.b16 %v453
        %v474 = vunpack.c.l.b16 %v454
        %v475 = vpack.c.b16 %v462, %v462
        %v476 = vpack.c.b16 %v463, %v463
        %v477 = vpack.c.b16 %v464, %v464
        %v478 = vpack.c.b16 %v465, %v465
        %v479 = vpack.c.b16 %v466, %v466
        %v480 = vpack.c.b16 %v467, %v467
        %v481 = vpack.c.b16 %v468, %v468
        %v482 = vpack.c.b16 %v469, %v469
        %v483 = vpack.c.b16 %v470, %v470
        %v484 = vpack.c.b16 %v471, %v471
        %v485 = vpack.c.b16 %v472, %v472
        %v486 = vpack.c.b16 %v473, %v473
        %v487 = vpack.c.b16 %v474, %v474
        %vm501 = vcmask 797696
        %502 = vst.msk [vmem:[#allocation2] sm:$0xf] %vm501, %v475
        %503 = vst.msk [vmem:[#allocation2 + $0x4] sm:$0xf] %vm501, %v476
        %504 = vst.msk [vmem:[#allocation2 + $0x8] sm:$0xf] %vm501, %v477
        %505 = vst.msk [vmem:[#allocation2 + $0xc] sm:$0xf] %vm501, %v478
        %506 = vst.msk [vmem:[#allocation2 + $0x10] sm:$0xf] %vm501, %v479
        %507 = vst.msk [vmem:[#allocation2 + $0x14] sm:$0xf] %vm501, %v480
        %508 = vst.msk [vmem:[#allocation2 + $0x18] sm:$0xf] %vm501, %v481
        %509 = vst.msk [vmem:[#allocation2 + $0x1c] sm:$0xf] %vm501, %v482
        %510 = vst.msk [vmem:[#allocation2 + $0x20] sm:$0xf] %vm501, %v483
        %511 = vst.msk [vmem:[#allocation2 + $0x24] sm:$0xf] %vm501, %v484
        %512 = vst.msk [vmem:[#allocation2 + $0x28] sm:$0xf] %vm501, %v485
        %513 = vst.msk [vmem:[#allocation2 + $0x2c] sm:$0xf] %vm501, %v486
        %514 = vst.msk [vmem:[#allocation2 + $0x30] sm:$0xf] %vm501, %v487
        %v515 = vld [vmem:[#allocation2] sm:$0xf]
        %v516 = vld [vmem:[#allocation2 + $0x4] sm:$0xf]
        %v517 = vld [vmem:[#allocation2 + $0x8] sm:$0xf]
        %v518 = vld [vmem:[#allocation2 + $0xc] sm:$0xf]
        %v519 = vld [vmem:[#allocation2 + $0x10] sm:$0xf]
        %v520 = vld [vmem:[#allocation2 + $0x14] sm:$0xf]
        %v521 = vld [vmem:[#allocation2 + $0x18] sm:$0xf]
        %v522 = vld [vmem:[#allocation2 + $0x1c] sm:$0xf]
        %v523 = vld [vmem:[#allocation2 + $0x20] sm:$0xf]
        %v524 = vld [vmem:[#allocation2 + $0x24] sm:$0xf]
        %v525 = vld [vmem:[#allocation2 + $0x28] sm:$0xf]
        %v526 = vld [vmem:[#allocation2 + $0x2c] sm:$0xf]
        %v527 = vld [vmem:[#allocation2 + $0x30] sm:$0xf]
        %v528 = vld [vmem:[#allocation5] sm:$0xf]
        %v529 = vld [vmem:[#allocation5 + $0x4] sm:$0xf]
        %v530 = vld [vmem:[#allocation5 + $0x8] sm:$0xf]
        %v531 = vld [vmem:[#allocation5 + $0xc] sm:$0xf]
        %v532 = vld [vmem:[#allocation5 + $0x10] sm:$0xf]
        %v533 = vld [vmem:[#allocation5 + $0x14] sm:$0xf]
        %v534 = vld [vmem:[#allocation5 + $0x18] sm:$0xf]
        %v535 = vld [vmem:[#allocation5 + $0x1c] sm:$0xf]
        %v536 = vld [vmem:[#allocation5 + $0x20] sm:$0xf]
        %v537 = vld [vmem:[#allocation5 + $0x24] sm:$0xf]
        %v538 = vld [vmem:[#allocation5 + $0x28] sm:$0xf]
        %v539 = vld [vmem:[#allocation5 + $0x2c] sm:$0xf]
        %v540 = vld [vmem:[#allocation5 + $0x30] sm:$0xf]
        %v541 = vld [vmem:[#allocation5 + $0x34] sm:$0xf]
        %v542 = vld [vmem:[#allocation5 + $0x38] sm:$0xf]
        %v543 = vld [vmem:[#allocation5 + $0x3c] sm:$0xf]
        %v544 = vld [vmem:[%s2] sm:$0x1]
        %v546 = vlaneseq
        %v547 = vshrl.u32 %v546, 7
        %v548 = vsub.s32 0, %v547
        %v549 = vrot.slane %v544, %v548
        %v564 = vunpack.c.l.b16 %v515
        %v565 = vunpack.c.l.b16 %v516
        %v566 = vunpack.c.l.b16 %v517
        %v567 = vunpack.c.l.b16 %v518
        %v568 = vunpack.c.l.b16 %v519
        %v569 = vunpack.c.l.b16 %v520
        %v570 = vunpack.c.l.b16 %v521
        %v571 = vunpack.c.l.b16 %v522
        %v572 = vunpack.c.l.b16 %v523
        %v573 = vunpack.c.l.b16 %v524
        %v574 = vunpack.c.l.b16 %v525
        %v575 = vunpack.c.l.b16 %v526
        %v576 = vunpack.c.l.b16 %v527
        %v577 = vpack.c.b16 %v565, %v564
        %v578 = vpack.c.b16 %v567, %v566
        %v579 = vpack.c.b16 %v569, %v568
        %v580 = vpack.c.b16 %v571, %v570
        %v581 = vpack.c.b16 %v573, %v572
        %v582 = vpack.c.b16 %v575, %v574
        %v583 = vpack.c.b16 %v576, %v576
        %v607 = vunpack.c.l.b16 %v528
        %v608 = vunpack.c.l.b16 %v529
        %v609 = vunpack.c.l.b16 %v530
        %v610 = vunpack.c.l.b16 %v531
        %v611 = vunpack.c.l.b16 %v532
        %v612 = vunpack.c.l.b16 %v533
        %v613 = vunpack.c.l.b16 %v534
        %v614 = vunpack.c.l.b16 %v535
        %v615 = vunpack.c.l.b16 %v536
        %v616 = vunpack.c.l.b16 %v537
        %v617 = vunpack.c.l.b16 %v538
        %v618 = vunpack.c.l.b16 %v539
        %v619 = vunpack.c.l.b16 %v540
        %v620 = vunpack.c.l.b16 %v541
        %v621 = vunpack.c.l.b16 %v542
        %v622 = vunpack.c.l.b16 %v543
        %v623 = vpack.c.b16 %v608, %v607
        %v624 = vpack.c.b16 %v610, %v609
        %v625 = vpack.c.b16 %v612, %v611
        %v626 = vpack.c.b16 %v614, %v613
        %v627 = vpack.c.b16 %v616, %v615
        %v628 = vpack.c.b16 %v618, %v617
        %v629 = vpack.c.b16 %v620, %v619
        %v630 = vpack.c.b16 %v622, %v621
        %639 = vmatprep.subr.bf16.mxu0 0
        %640 = vmatpush1.bf16.msra.mxu0 %v630
        %641 = vmatprep.subr.bf16.mxu0 0
        %642 = vmatpush1.bf16.msra.mxu0 %v629
        %643 = vmatprep.subr.bf16.mxu0 0
        %644 = vmatpush1.bf16.msra.mxu0 %v628
        %645 = vmatprep.subr.bf16.mxu0 0
        %646 = vmatpush1.bf16.msra.mxu0 %v627
        %647 = vmatprep.subr.bf16.mxu0 0
        %648 = vmatpush1.bf16.msra.mxu0 %v626
        %649 = vmatprep.subr.bf16.mxu0 0
        %650 = vmatpush1.bf16.msra.mxu0 %v625
        %651 = vmatprep.subr.bf16.mxu0 0
        %652 = vmatpush1.bf16.msra.mxu0 %v624
        %653 = vmatprep.subr.bf16.mxu0 0
        %654 = vmatpush1.bf16.msra.mxu0 %v623
        %655 = vmatprep.subr.bf16.mxu0 0
        %656 = vmatpush2.bf16.msra.mxu0 0
        %657 = vmatprep.subr.bf16.mxu0 0
        %658 = vmatpush2.bf16.msra.mxu0 0
        %659 = vmatprep.subr.bf16.mxu0 0
        %660 = vmatpush2.bf16.msra.mxu0 0
        %661 = vmatprep.subr.bf16.mxu0 0
        %662 = vmatpush2.bf16.msra.mxu0 0
        %663 = vmatprep.subr.bf16.mxu0 0
        %664 = vmatpush2.bf16.msra.mxu0 0
        %665 = vmatprep.subr.bf16.mxu0 0
        %666 = vmatpush2.bf16.msra.mxu0 0
        %667 = vmatprep.subr.bf16.mxu0 0
        %668 = vmatpush2.bf16.msra.mxu0 0
        %669 = vmatprep.subr.bf16.mxu0 0
        %670 = vmatpush2.bf16.msra.mxu0 0
        %671 = vmatprep.mubr.bf16.mxu0 0
        %672 = vmatmul.mubr.bf16.gmra.mxu0 %v577
        %v673 = vpop.f32.mrf.mxu0
        %v674 = vadd.f32 %v549, %v673
        %v675 = vpop.f32.mrf.mxu0
        %v676 = vpop.f32.mrf.mxu0
        %v677 = vadd.f32 %v549, %v676
        %v678 = vpop.f32.mrf.mxu0
        %679 = vmatprep.mubr.bf16.mxu0 0
        %680 = vmatmul.mubr.bf16.gmra.mxu0 %v578
        %v681 = vpop.f32.mrf.mxu0
        %v682 = vadd.f32 %v549, %v681
        %v683 = vpop.f32.mrf.mxu0
        %v684 = vpop.f32.mrf.mxu0
        %v685 = vadd.f32 %v549, %v684
        %v686 = vpop.f32.mrf.mxu0
        %687 = vmatprep.mubr.bf16.mxu0 0
        %688 = vmatmul.mubr.bf16.gmra.mxu0 %v579
        %v689 = vpop.f32.mrf.mxu0
        %v690 = vadd.f32 %v549, %v689
        %v691 = vpop.f32.mrf.mxu0
        %v692 = vpop.f32.mrf.mxu0
        %v693 = vadd.f32 %v549, %v692
        %v694 = vpop.f32.mrf.mxu0
        %695 = vmatprep.mubr.bf16.mxu0 0
        %696 = vmatmul.mubr.bf16.gmra.mxu0 %v580
        %v697 = vpop.f32.mrf.mxu0
        %v698 = vadd.f32 %v549, %v697
        %v699 = vpop.f32.mrf.mxu0
        %v700 = vpop.f32.mrf.mxu0
        %v701 = vadd.f32 %v549, %v700
        %v702 = vpop.f32.mrf.mxu0
        %703 = vmatprep.mubr.bf16.mxu0 0
        %704 = vmatmul.mubr.bf16.gmra.mxu0 %v581
        %v705 = vpop.f32.mrf.mxu0
        %v706 = vadd.f32 %v549, %v705
        %v707 = vpop.f32.mrf.mxu0
        %v708 = vpop.f32.mrf.mxu0
        %v709 = vadd.f32 %v549, %v708
        %v710 = vpop.f32.mrf.mxu0
        %711 = vmatprep.mubr.bf16.mxu0 0
        %712 = vmatmul.mubr.bf16.gmra.mxu0 %v582
        %v713 = vpop.f32.mrf.mxu0
        %v714 = vadd.f32 %v549, %v713
        %v715 = vpop.f32.mrf.mxu0
        %v716 = vpop.f32.mrf.mxu0
        %v717 = vadd.f32 %v549, %v716
        %v718 = vpop.f32.mrf.mxu0
        %719 = vmatprep.mubr.bf16.mxu0 0
        %720 = vmatmul.mubr.bf16.gmra.mxu0 %v583
        %v721 = vpop.f32.mrf.mxu0
        %v722 = vadd.f32 %v549, %v721
        %v723 = vpop.f32.mrf.mxu0
        %v724 = vpop.f32.mrf.mxu0
        %v725 = vpop.f32.mrf.mxu0
        %726 = vdwg.mxu0
        %v727 = vmax.f32 %v674, 0.0
        %v728 = vmax.f32 %v677, 0.0
        %v729 = vmax.f32 %v682, 0.0
        %v730 = vmax.f32 %v685, 0.0
        %v731 = vmax.f32 %v690, 0.0
        %v732 = vmax.f32 %v693, 0.0
        %v733 = vmax.f32 %v698, 0.0
        %v734 = vmax.f32 %v701, 0.0
        %v735 = vmax.f32 %v706, 0.0
        %v736 = vmax.f32 %v709, 0.0
        %v737 = vmax.f32 %v714, 0.0
        %v738 = vmax.f32 %v717, 0.0
        %v739 = vmax.f32 %v722, 0.0
        %v740 = vpack.c.bf16 %v728, %v727
        %v741 = vpack.c.bf16 %v730, %v729
        %v742 = vpack.c.bf16 %v732, %v731
        %v743 = vpack.c.bf16 %v734, %v733
        %v744 = vpack.c.bf16 %v736, %v735
        %v745 = vpack.c.bf16 %v738, %v737
        %v746 = vpack.c.bf16 %v739, %v739
        %v747 = vld [vmem:[#allocation7] sm:$0xf]
        %v748 = vld [vmem:[#allocation7 + $0x4] sm:$0xf]
        %v749 = vld [vmem:[#allocation7 + $0x8] sm:$0xf]
        %v750 = vld [vmem:[#allocation7 + $0xc] sm:$0xf]
        %v751 = vld [vmem:[#allocation7 + $0x10] sm:$0xf]
        %v752 = vld [vmem:[#allocation7 + $0x14] sm:$0xf]
        %v753 = vld [vmem:[#allocation7 + $0x18] sm:$0xf]
        %v754 = vld [vmem:[#allocation7 + $0x1c] sm:$0xf]
        %v755 = vld [vmem:[#allocation7 + $0x20] sm:$0xf]
        %v756 = vld [vmem:[#allocation7 + $0x24] sm:$0xf]
        %v757 = vld [vmem:[#allocation7 + $0x28] sm:$0xf]
        %v758 = vld [vmem:[#allocation7 + $0x2c] sm:$0xf]
        %v759 = vld [vmem:[#allocation7 + $0x30] sm:$0xf]
        %v760 = vld [vmem:[#allocation7 + $0x34] sm:$0xf]
        %v761 = vld [vmem:[#allocation7 + $0x38] sm:$0xf]
        %v762 = vld [vmem:[#allocation7 + $0x3c] sm:$0xf]
        %v763 = vld [vmem:[%s4] sm:$0x1]
        %v765 = vlaneseq
        %v766 = vshrl.u32 %v765, 7
        %v767 = vsub.s32 0, %v766
        %v768 = vrot.slane %v763, %v767
        %v786 = vunpack.c.l.b16 %v747
        %v787 = vunpack.c.l.b16 %v748
        %v788 = vunpack.c.l.b16 %v749
        %v789 = vunpack.c.l.b16 %v750
        %v790 = vunpack.c.l.b16 %v751
        %v791 = vunpack.c.l.b16 %v752
        %v792 = vunpack.c.l.b16 %v753
        %v793 = vunpack.c.l.b16 %v754
        %v794 = vunpack.c.l.b16 %v755
        %v795 = vunpack.c.l.b16 %v756
        %v796 = vunpack.c.l.b16 %v757
        %v797 = vunpack.c.l.b16 %v758
        %v798 = vunpack.c.l.b16 %v759
        %v799 = vunpack.c.l.b16 %v760
        %v800 = vunpack.c.l.b16 %v761
        %v801 = vunpack.c.l.b16 %v762
        %v802 = vpack.c.b16 %v787, %v786
        %v803 = vpack.c.b16 %v789, %v788
        %v804 = vpack.c.b16 %v791, %v790
        %v805 = vpack.c.b16 %v793, %v792
        %v806 = vpack.c.b16 %v795, %v794
        %v807 = vpack.c.b16 %v797, %v796
        %v808 = vpack.c.b16 %v799, %v798
        %v809 = vpack.c.b16 %v801, %v800
        %818 = vmatprep.subr.bf16.mxu0 0
        %819 = vmatpush1.bf16.msra.mxu0 %v809
        %820 = vmatprep.subr.bf16.mxu0 0
        %821 = vmatpush1.bf16.msra.mxu0 %v808
        %822 = vmatprep.subr.bf16.mxu0 0
        %823 = vmatpush1.bf16.msra.mxu0 %v807
        %824 = vmatprep.subr.bf16.mxu0 0
        %825 = vmatpush1.bf16.msra.mxu0 %v806
        %826 = vmatprep.subr.bf16.mxu0 0
        %827 = vmatpush1.bf16.msra.mxu0 %v805
        %828 = vmatprep.subr.bf16.mxu0 0
        %829 = vmatpush1.bf16.msra.mxu0 %v804
        %830 = vmatprep.subr.bf16.mxu0 0
        %831 = vmatpush1.bf16.msra.mxu0 %v803
        %832 = vmatprep.subr.bf16.mxu0 0
        %833 = vmatpush1.bf16.msra.mxu0 %v802
        %834 = vmatprep.subr.bf16.mxu0 0
        %835 = vmatpush2.bf16.msra.mxu0 0
        %836 = vmatprep.subr.bf16.mxu0 0
        %837 = vmatpush2.bf16.msra.mxu0 0
        %838 = vmatprep.subr.bf16.mxu0 0
        %839 = vmatpush2.bf16.msra.mxu0 0
        %840 = vmatprep.subr.bf16.mxu0 0
        %841 = vmatpush2.bf16.msra.mxu0 0
        %842 = vmatprep.subr.bf16.mxu0 0
        %843 = vmatpush2.bf16.msra.mxu0 0
        %844 = vmatprep.subr.bf16.mxu0 0
        %845 = vmatpush2.bf16.msra.mxu0 0
        %846 = vmatprep.subr.bf16.mxu0 0
        %847 = vmatpush2.bf16.msra.mxu0 0
        %848 = vmatprep.subr.bf16.mxu0 0
        %849 = vmatpush2.bf16.msra.mxu0 0
        %850 = vmatprep.mubr.bf16.mxu0 0
        %851 = vmatmul.mubr.bf16.gmra.mxu0 %v740
        %v852 = vpop.f32.mrf.mxu0
        %v853 = vadd.f32 %v768, %v852
        %v854 = vpop.f32.mrf.mxu0
        %v855 = vpop.f32.mrf.mxu0
        %v856 = vadd.f32 %v768, %v855
        %v857 = vpop.f32.mrf.mxu0
        %858 = vmatprep.mubr.bf16.mxu0 0
        %859 = vmatmul.mubr.bf16.gmra.mxu0 %v741
        %v860 = vpop.f32.mrf.mxu0
        %v861 = vadd.f32 %v768, %v860
        %v862 = vpop.f32.mrf.mxu0
        %v863 = vpop.f32.mrf.mxu0
        %v864 = vadd.f32 %v768, %v863
        %v865 = vpop.f32.mrf.mxu0
        %866 = vmatprep.mubr.bf16.mxu0 0
        %867 = vmatmul.mubr.bf16.gmra.mxu0 %v742
        %v868 = vpop.f32.mrf.mxu0
        %v869 = vadd.f32 %v768, %v868
        %v870 = vpop.f32.mrf.mxu0
        %v871 = vpop.f32.mrf.mxu0
        %v872 = vadd.f32 %v768, %v871
        %v873 = vpop.f32.mrf.mxu0
        %874 = vmatprep.mubr.bf16.mxu0 0
        %875 = vmatmul.mubr.bf16.gmra.mxu0 %v743
        %v876 = vpop.f32.mrf.mxu0
        %v877 = vadd.f32 %v768, %v876
        %v878 = vpop.f32.mrf.mxu0
        %v879 = vpop.f32.mrf.mxu0
        %v880 = vadd.f32 %v768, %v879
        %v881 = vpop.f32.mrf.mxu0
        %882 = vmatprep.mubr.bf16.mxu0 0
        %883 = vmatmul.mubr.bf16.gmra.mxu0 %v744
        %v884 = vpop.f32.mrf.mxu0
        %v885 = vadd.f32 %v768, %v884
        %v886 = vpop.f32.mrf.mxu0
        %v887 = vpop.f32.mrf.mxu0
        %v888 = vadd.f32 %v768, %v887
        %v889 = vpop.f32.mrf.mxu0
        %890 = vmatprep.mubr.bf16.mxu0 0
        %891 = vmatmul.mubr.bf16.gmra.mxu0 %v745
        %v892 = vpop.f32.mrf.mxu0
        %v893 = vadd.f32 %v768, %v892
        %v894 = vpop.f32.mrf.mxu0
        %v895 = vpop.f32.mrf.mxu0
        %v896 = vadd.f32 %v768, %v895
        %v897 = vpop.f32.mrf.mxu0
        %898 = vmatprep.mubr.bf16.mxu0 0
        %899 = vmatmul.mubr.bf16.gmra.mxu0 %v746
        %v900 = vpop.f32.mrf.mxu0
        %v901 = vadd.f32 %v768, %v900
        %v902 = vpop.f32.mrf.mxu0
        %v903 = vpop.f32.mrf.mxu0
        %v904 = vpop.f32.mrf.mxu0
        %905 = vdwg.mxu0
        %v906 = vmax.f32 %v853, 0.0
        %v907 = vmax.f32 %v856, 0.0
        %v908 = vmax.f32 %v861, 0.0
        %v909 = vmax.f32 %v864, 0.0
        %v910 = vmax.f32 %v869, 0.0
        %v911 = vmax.f32 %v872, 0.0
        %v912 = vmax.f32 %v877, 0.0
        %v913 = vmax.f32 %v880, 0.0
        %v914 = vmax.f32 %v885, 0.0
        %v915 = vmax.f32 %v888, 0.0
        %v916 = vmax.f32 %v893, 0.0
        %v917 = vmax.f32 %v896, 0.0
        %v918 = vmax.f32 %v901, 0.0
        %v919 = vpack.c.bf16 %v907, %v906
        %v920 = vpack.c.bf16 %v909, %v908
        %v921 = vpack.c.bf16 %v911, %v910
        %v922 = vpack.c.bf16 %v913, %v912
        %v923 = vpack.c.bf16 %v915, %v914
        %v924 = vpack.c.bf16 %v917, %v916
        %v925 = vpack.c.bf16 %v918, %v918
        %v926 = vld [vmem:[#allocation8] sm:$0xf]
        %v927 = vld [vmem:[#allocation8 + $0x4] sm:$0xf]
        %v928 = vld [vmem:[#allocation8 + $0x8] sm:$0xf]
        %v929 = vld [vmem:[#allocation8 + $0xc] sm:$0xf]
        %v930 = vld [vmem:[#allocation8 + $0x10] sm:$0xf]
        %v931 = vld [vmem:[#allocation8 + $0x14] sm:$0xf]
        %v932 = vld [vmem:[#allocation8 + $0x18] sm:$0xf]
        %v933 = vld [vmem:[#allocation8 + $0x1c] sm:$0xf]
        %v934 = vld [vmem:[#allocation8 + $0x20] sm:$0xf]
        %v935 = vld [vmem:[#allocation8 + $0x24] sm:$0xf]
        %v936 = vld [vmem:[#allocation8 + $0x28] sm:$0xf]
        %v937 = vld [vmem:[#allocation8 + $0x2c] sm:$0xf]
        %v938 = vld [vmem:[#allocation8 + $0x30] sm:$0xf]
        %v939 = vld [vmem:[#allocation8 + $0x34] sm:$0xf]
        %v940 = vld [vmem:[#allocation8 + $0x38] sm:$0xf]
        %v941 = vld [vmem:[#allocation8 + $0x3c] sm:$0xf]
        %v942 = vld [vmem:[%s6] sm:$0x1]
        %v944 = vlaneseq
        %v945 = vshrl.u32 %v944, 7
        %v946 = vsub.s32 0, %v945
        %v947 = vrot.slane %v942, %v946
        %v965 = vunpack.c.l.b16 %v926
        %v966 = vunpack.c.l.b16 %v927
        %v967 = vunpack.c.l.b16 %v928
        %v968 = vunpack.c.l.b16 %v929
        %v969 = vunpack.c.l.b16 %v930
        %v970 = vunpack.c.l.b16 %v931
        %v971 = vunpack.c.l.b16 %v932
        %v972 = vunpack.c.l.b16 %v933
        %v973 = vunpack.c.l.b16 %v934
        %v974 = vunpack.c.l.b16 %v935
        %v975 = vunpack.c.l.b16 %v936
        %v976 = vunpack.c.l.b16 %v937
        %v977 = vunpack.c.l.b16 %v938
        %v978 = vunpack.c.l.b16 %v939
        %v979 = vunpack.c.l.b16 %v940
        %v980 = vunpack.c.l.b16 %v941
        %v981 = vpack.c.b16 %v966, %v965
        %v982 = vpack.c.b16 %v968, %v967
        %v983 = vpack.c.b16 %v970, %v969
        %v984 = vpack.c.b16 %v972, %v971
        %v985 = vpack.c.b16 %v974, %v973
        %v986 = vpack.c.b16 %v976, %v975
        %v987 = vpack.c.b16 %v978, %v977
        %v988 = vpack.c.b16 %v980, %v979
        %997 = vmatprep.subr.bf16.mxu0 0
        %998 = vmatpush1.bf16.msra.mxu0 %v988
        %999 = vmatprep.subr.bf16.mxu0 0
        %1000 = vmatpush1.bf16.msra.mxu0 %v987
        %1001 = vmatprep.subr.bf16.mxu0 0
        %1002 = vmatpush1.bf16.msra.mxu0 %v986
        %1003 = vmatprep.subr.bf16.mxu0 0
        %1004 = vmatpush1.bf16.msra.mxu0 %v985
        %1005 = vmatprep.subr.bf16.mxu0 0
        %1006 = vmatpush1.bf16.msra.mxu0 %v984
        %1007 = vmatprep.subr.bf16.mxu0 0
        %1008 = vmatpush1.bf16.msra.mxu0 %v983
        %1009 = vmatprep.subr.bf16.mxu0 0
        %1010 = vmatpush1.bf16.msra.mxu0 %v982
        %1011 = vmatprep.subr.bf16.mxu0 0
        %1012 = vmatpush1.bf16.msra.mxu0 %v981
        %1013 = vmatprep.subr.bf16.mxu0 0
        %1014 = vmatpush2.bf16.msra.mxu0 0
        %1015 = vmatprep.subr.bf16.mxu0 0
        %1016 = vmatpush2.bf16.msra.mxu0 0
        %1017 = vmatprep.subr.bf16.mxu0 0
        %1018 = vmatpush2.bf16.msra.mxu0 0
        %1019 = vmatprep.subr.bf16.mxu0 0
        %1020 = vmatpush2.bf16.msra.mxu0 0
        %1021 = vmatprep.subr.bf16.mxu0 0
        %1022 = vmatpush2.bf16.msra.mxu0 0
        %1023 = vmatprep.subr.bf16.mxu0 0
        %1024 = vmatpush2.bf16.msra.mxu0 0
        %1025 = vmatprep.subr.bf16.mxu0 0
        %1026 = vmatpush2.bf16.msra.mxu0 0
        %1027 = vmatprep.subr.bf16.mxu0 0
        %1028 = vmatpush2.bf16.msra.mxu0 0
        %1029 = vmatprep.mubr.bf16.mxu0 0
        %1030 = vmatmul.mubr.bf16.gmra.mxu0 %v919
        %v1031 = vpop.f32.mrf.mxu0
        %v1032 = vadd.f32 %v947, %v1031
        %v1033 = vpop.f32.mrf.mxu0
        %v1034 = vpop.f32.mrf.mxu0
        %v1035 = vadd.f32 %v947, %v1034
        %v1036 = vpop.f32.mrf.mxu0
        %1037 = vmatprep.mubr.bf16.mxu0 0
        %1038 = vmatmul.mubr.bf16.gmra.mxu0 %v920
        %v1039 = vpop.f32.mrf.mxu0
        %v1040 = vadd.f32 %v947, %v1039
        %v1041 = vpop.f32.mrf.mxu0
        %v1042 = vpop.f32.mrf.mxu0
        %v1043 = vadd.f32 %v947, %v1042
        %v1044 = vpop.f32.mrf.mxu0
        %1045 = vmatprep.mubr.bf16.mxu0 0
        %1046 = vmatmul.mubr.bf16.gmra.mxu0 %v921
        %v1047 = vpop.f32.mrf.mxu0
        %v1048 = vadd.f32 %v947, %v1047
        %v1049 = vpop.f32.mrf.mxu0
        %v1050 = vpop.f32.mrf.mxu0
        %v1051 = vadd.f32 %v947, %v1050
        %v1052 = vpop.f32.mrf.mxu0
        %1053 = vmatprep.mubr.bf16.mxu0 0
        %1054 = vmatmul.mubr.bf16.gmra.mxu0 %v922
        %v1055 = vpop.f32.mrf.mxu0
        %v1056 = vadd.f32 %v947, %v1055
        %v1057 = vpop.f32.mrf.mxu0
        %v1058 = vpop.f32.mrf.mxu0
        %v1059 = vadd.f32 %v947, %v1058
        %v1060 = vpop.f32.mrf.mxu0
        %1061 = vmatprep.mubr.bf16.mxu0 0
        %1062 = vmatmul.mubr.bf16.gmra.mxu0 %v923
        %v1063 = vpop.f32.mrf.mxu0
        %v1064 = vadd.f32 %v947, %v1063
        %v1065 = vpop.f32.mrf.mxu0
        %v1066 = vpop.f32.mrf.mxu0
        %v1067 = vadd.f32 %v947, %v1066
        %v1068 = vpop.f32.mrf.mxu0
        %1069 = vmatprep.mubr.bf16.mxu0 0
        %1070 = vmatmul.mubr.bf16.gmra.mxu0 %v924
        %v1071 = vpop.f32.mrf.mxu0
        %v1072 = vadd.f32 %v947, %v1071
        %v1073 = vpop.f32.mrf.mxu0
        %v1074 = vpop.f32.mrf.mxu0
        %v1075 = vadd.f32 %v947, %v1074
        %v1076 = vpop.f32.mrf.mxu0
        %1077 = vmatprep.mubr.bf16.mxu0 0
        %1078 = vmatmul.mubr.bf16.gmra.mxu0 %v925
        %v1079 = vpop.f32.mrf.mxu0
        %v1080 = vadd.f32 %v947, %v1079
        %v1081 = vpop.f32.mrf.mxu0
        %v1082 = vpop.f32.mrf.mxu0
        %v1083 = vpop.f32.mrf.mxu0
        %1084 = vdwg.mxu0
        %v1085 = vmax.f32 %v1032, 0.0
        %v1086 = vmax.f32 %v1035, 0.0
        %v1087 = vmax.f32 %v1040, 0.0
        %v1088 = vmax.f32 %v1043, 0.0
        %v1089 = vmax.f32 %v1048, 0.0
        %v1090 = vmax.f32 %v1051, 0.0
        %v1091 = vmax.f32 %v1056, 0.0
        %v1092 = vmax.f32 %v1059, 0.0
        %v1093 = vmax.f32 %v1064, 0.0
        %v1094 = vmax.f32 %v1067, 0.0
        %v1095 = vmax.f32 %v1072, 0.0
        %v1096 = vmax.f32 %v1075, 0.0
        %v1097 = vmax.f32 %v1080, 0.0
        %v1098 = vpack.c.bf16 %v1086, %v1085
        %v1099 = vpack.c.bf16 %v1088, %v1087
        %v1100 = vpack.c.bf16 %v1090, %v1089
        %v1101 = vpack.c.bf16 %v1092, %v1091
        %v1102 = vpack.c.bf16 %v1094, %v1093
        %v1103 = vpack.c.bf16 %v1096, %v1095
        %v1104 = vpack.c.bf16 %v1097, %v1097
        %v1105 = vld [vmem:[#allocation10] sm:$0xf]
        %v1106 = vld [vmem:[#allocation10 + $0x4] sm:$0xf]
        %v1107 = vld [vmem:[#allocation10 + $0x8] sm:$0xf]
        %v1108 = vld [vmem:[#allocation10 + $0xc] sm:$0xf]
        %v1109 = vld [vmem:[#allocation10 + $0x10] sm:$0xf]
        %v1110 = vld [vmem:[#allocation10 + $0x14] sm:$0xf]
        %v1111 = vld [vmem:[#allocation10 + $0x18] sm:$0xf]
        %v1112 = vld [vmem:[#allocation10 + $0x1c] sm:$0xf]
        %v1113 = vld [vmem:[#allocation10 + $0x20] sm:$0xf]
        %v1114 = vld [vmem:[#allocation10 + $0x24] sm:$0xf]
        %v1115 = vld [vmem:[#allocation10 + $0x28] sm:$0xf]
        %v1116 = vld [vmem:[#allocation10 + $0x2c] sm:$0xf]
        %v1117 = vld [vmem:[#allocation10 + $0x30] sm:$0xf]
        %v1118 = vld [vmem:[#allocation10 + $0x34] sm:$0xf]
        %v1119 = vld [vmem:[#allocation10 + $0x38] sm:$0xf]
        %v1120 = vld [vmem:[#allocation10 + $0x3c] sm:$0xf]
        %v1121 = vld [vmem:[%s8] sm:$0x1]
        %v1123 = vlaneseq
        %v1124 = vshrl.u32 %v1123, 7
        %v1125 = vsub.s32 0, %v1124
        %v1126 = vrot.slane %v1121, %v1125
        %v1144 = vunpack.c.l.b16 %v1105
        %v1145 = vunpack.c.l.b16 %v1106
        %v1146 = vunpack.c.l.b16 %v1107
        %v1147 = vunpack.c.l.b16 %v1108
        %v1148 = vunpack.c.l.b16 %v1109
        %v1149 = vunpack.c.l.b16 %v1110
        %v1150 = vunpack.c.l.b16 %v1111
        %v1151 = vunpack.c.l.b16 %v1112
        %v1152 = vunpack.c.l.b16 %v1113
        %v1153 = vunpack.c.l.b16 %v1114
        %v1154 = vunpack.c.l.b16 %v1115
        %v1155 = vunpack.c.l.b16 %v1116
        %v1156 = vunpack.c.l.b16 %v1117
        %v1157 = vunpack.c.l.b16 %v1118
        %v1158 = vunpack.c.l.b16 %v1119
        %v1159 = vunpack.c.l.b16 %v1120
        %v1160 = vpack.c.b16 %v1145, %v1144
        %v1161 = vpack.c.b16 %v1147, %v1146
        %v1162 = vpack.c.b16 %v1149, %v1148
        %v1163 = vpack.c.b16 %v1151, %v1150
        %v1164 = vpack.c.b16 %v1153, %v1152
        %v1165 = vpack.c.b16 %v1155, %v1154
        %v1166 = vpack.c.b16 %v1157, %v1156
        %v1167 = vpack.c.b16 %v1159, %v1158
        %1176 = vmatprep.subr.bf16.mxu0 0
        %1177 = vmatpush1.bf16.msra.mxu0 %v1167
        %1178 = vmatprep.subr.bf16.mxu0 0
        %1179 = vmatpush1.bf16.msra.mxu0 %v1166
        %1180 = vmatprep.subr.bf16.mxu0 0
        %1181 = vmatpush1.bf16.msra.mxu0 %v1165
        %1182 = vmatprep.subr.bf16.mxu0 0
        %1183 = vmatpush1.bf16.msra.mxu0 %v1164
        %1184 = vmatprep.subr.bf16.mxu0 0
        %1185 = vmatpush1.bf16.msra.mxu0 %v1163
        %1186 = vmatprep.subr.bf16.mxu0 0
        %1187 = vmatpush1.bf16.msra.mxu0 %v1162
        %1188 = vmatprep.subr.bf16.mxu0 0
        %1189 = vmatpush1.bf16.msra.mxu0 %v1161
        %1190 = vmatprep.subr.bf16.mxu0 0
        %1191 = vmatpush1.bf16.msra.mxu0 %v1160
        %1192 = vmatprep.subr.bf16.mxu0 0
        %1193 = vmatpush2.bf16.msra.mxu0 0
        %1194 = vmatprep.subr.bf16.mxu0 0
        %1195 = vmatpush2.bf16.msra.mxu0 0
        %1196 = vmatprep.subr.bf16.mxu0 0
        %1197 = vmatpush2.bf16.msra.mxu0 0
        %1198 = vmatprep.subr.bf16.mxu0 0
        %1199 = vmatpush2.bf16.msra.mxu0 0
        %1200 = vmatprep.subr.bf16.mxu0 0
        %1201 = vmatpush2.bf16.msra.mxu0 0
        %1202 = vmatprep.subr.bf16.mxu0 0
        %1203 = vmatpush2.bf16.msra.mxu0 0
        %1204 = vmatprep.subr.bf16.mxu0 0
        %1205 = vmatpush2.bf16.msra.mxu0 0
        %1206 = vmatprep.subr.bf16.mxu0 0
        %1207 = vmatpush2.bf16.msra.mxu0 0
        %1208 = vmatprep.mubr.bf16.mxu0 0
        %1209 = vmatmul.mubr.bf16.gmra.mxu0 %v1098
        %v1210 = vpop.f32.mrf.mxu0
        %v1211 = vadd.f32 %v1126, %v1210
        %v1212 = vpop.f32.mrf.mxu0
        %v1213 = vpop.f32.mrf.mxu0
        %v1214 = vadd.f32 %v1126, %v1213
        %v1215 = vpop.f32.mrf.mxu0
        %1216 = vmatprep.mubr.bf16.mxu0 0
        %1217 = vmatmul.mubr.bf16.gmra.mxu0 %v1099
        %v1218 = vpop.f32.mrf.mxu0
        %v1219 = vadd.f32 %v1126, %v1218
        %v1220 = vpop.f32.mrf.mxu0
        %v1221 = vpop.f32.mrf.mxu0
        %v1222 = vadd.f32 %v1126, %v1221
        %v1223 = vpop.f32.mrf.mxu0
        %1224 = vmatprep.mubr.bf16.mxu0 0
        %1225 = vmatmul.mubr.bf16.gmra.mxu0 %v1100
        %v1226 = vpop.f32.mrf.mxu0
        %v1227 = vadd.f32 %v1126, %v1226
        %v1228 = vpop.f32.mrf.mxu0
        %v1229 = vpop.f32.mrf.mxu0
        %v1230 = vadd.f32 %v1126, %v1229
        %v1231 = vpop.f32.mrf.mxu0
        %1232 = vmatprep.mubr.bf16.mxu0 0
        %1233 = vmatmul.mubr.bf16.gmra.mxu0 %v1101
        %v1234 = vpop.f32.mrf.mxu0
        %v1235 = vadd.f32 %v1126, %v1234
        %v1236 = vpop.f32.mrf.mxu0
        %v1237 = vpop.f32.mrf.mxu0
        %v1238 = vadd.f32 %v1126, %v1237
        %v1239 = vpop.f32.mrf.mxu0
        %1240 = vmatprep.mubr.bf16.mxu0 0
        %1241 = vmatmul.mubr.bf16.gmra.mxu0 %v1102
        %v1242 = vpop.f32.mrf.mxu0
        %v1243 = vadd.f32 %v1126, %v1242
        %v1244 = vpop.f32.mrf.mxu0
        %v1245 = vpop.f32.mrf.mxu0
        %v1246 = vadd.f32 %v1126, %v1245
        %v1247 = vpop.f32.mrf.mxu0
        %1248 = vmatprep.mubr.bf16.mxu0 0
        %1249 = vmatmul.mubr.bf16.gmra.mxu0 %v1103
        %v1250 = vpop.f32.mrf.mxu0
        %v1251 = vadd.f32 %v1126, %v1250
        %v1252 = vpop.f32.mrf.mxu0
        %v1253 = vpop.f32.mrf.mxu0
        %v1254 = vadd.f32 %v1126, %v1253
        %v1255 = vpop.f32.mrf.mxu0
        %1256 = vmatprep.mubr.bf16.mxu0 0
        %1257 = vmatmul.mubr.bf16.gmra.mxu0 %v1104
        %v1258 = vpop.f32.mrf.mxu0
        %v1259 = vadd.f32 %v1126, %v1258
        %v1260 = vpop.f32.mrf.mxu0
        %v1261 = vpop.f32.mrf.mxu0
        %v1262 = vpop.f32.mrf.mxu0
        %1263 = vdwg.mxu0
        %vm1264 = vcmask 72704
        %1265 = vst.msk [vmem:[%s410] sm:$0xff] %vm1264, %v1211
        %1266 = vst.msk [vmem:[%s410 + $0x8] sm:$0xff] %vm1264, %v1214
        %1267 = vst.msk [vmem:[%s410 + $0x10] sm:$0xff] %vm1264, %v1219
        %1268 = vst.msk [vmem:[%s410 + $0x18] sm:$0xff] %vm1264, %v1222
        %1269 = vst.msk [vmem:[%s410 + $0x20] sm:$0xff] %vm1264, %v1227
        %1270 = vst.msk [vmem:[%s410 + $0x28] sm:$0xff] %vm1264, %v1230
        %1271 = vst.msk [vmem:[%s410 + $0x30] sm:$0xff] %vm1264, %v1235
        %1272 = vst.msk [vmem:[%s410 + $0x38] sm:$0xff] %vm1264, %v1238
        %1273 = vst.msk [vmem:[%s410 + $0x40] sm:$0xff] %vm1264, %v1243
        %1274 = vst.msk [vmem:[%s410 + $0x48] sm:$0xff] %vm1264, %v1246
        %1275 = vst.msk [vmem:[%s410 + $0x50] sm:$0xff] %vm1264, %v1251
        %1276 = vst.msk [vmem:[%s410 + $0x58] sm:$0xff] %vm1264, %v1254
        %1277 = vst.msk [vmem:[%s410 + $0x60] sm:$0xff] %vm1264, %v1259
        %s1278 = sand.u32 %s227, 1
        %s1279 = sand.u32 %s227, 1
        %s1280 = smul.addr %s1279, 104
        %s1281 = scalar_lea.vmem [#allocation11], %s1280
        // Predicated region
        $region77: #{network_forward.1} parent=55 // pred_check
          %p1282 = pneg %p237
        $region78: #{network_forward.1} parent=55 // pred_check_branch
          %1284 = sbr.rel (%p1282) target = $region80
        $region79: #{network_forward.1} parent=55 // pred_region
          %s1285 = smul.u32 13, %s25
          %s1286 = ssub.s32 25, %s1285
          %p1287 = scmp.lt.s32.totalorder %s1286, 13
          %s1288 = scalar_select %p1287, %s1286, 13
          %s1289 = smul.u32 128, %s1288
          %p1290 = scmp.ne.s32.totalorder 0, %s1289
          %s1291 = smul.addr %s1285, 8
          %s1292 = scalar_lea.vmem %s9, %s1291
          // Predicated region
          $region81: #{network_forward.1} parent=79 // pred_check
            %p1293 = pneg %p1290
          $region82: #{network_forward.1} parent=79 // pred_check_branch
            %1295 = sbr.rel (%p1293) target = $region84
          $region83: #{network_forward.1} parent=79 // pred_region
            // Predicated region
            $region85: #{network_forward.1} parent=83 // pred_check
              _
            $region86: #{network_forward.1} parent=83 // pred_check_branch
              %1297 = sbr.rel (0) target = $region88
            $region87: #{network_forward.1} parent=83 // pred_region
              // Predicated region
              $region107: #{network_forward.1} parent=87 // pred_check
                _
              $region108: #{network_forward.1} parent=87 // pred_check_branch
                %1372 = sbr.rel (0) target = $region110
              $region109: #{network_forward.1} parent=87 // pred_region
                %s1373 = sdiv.u32.pop %s1288, 13
                %s1374 = srem.u32.pop %s1288, 13
                // While loop
                $region111: #{network_forward.1} parent=109 // loop_pre_header
                  _
                $region112: #{network_forward.1} parent=109 // loop_header
                  %s1376 = sphi 0, %s1378
                  %p1377 = scmp.ge.s32.totalorder %s1376, %s1373
                  %s1381 = sphi 0, %s1412
                  %s1382 = sphi %s1281, %s1415
                  %s1383 = sphi %s1292, %s1416
                $region113: #{network_forward.1} parent=109 // loop_header_branch
                  %1380 = sbr.rel (%p1377) target = $region117
                $region114: #{network_forward.1} parent=109 // loop_body
                  %v1384 = vld [vmem:[%s1382] sm:$0xff]
                  %1385 = vst [vmem:[%s1383] sm:$0xff] %v1384
                  %v1386 = vld [vmem:[%s1382 + $0x8] sm:$0xff]
                  %1387 = vst [vmem:[%s1383 + $0x8] sm:$0xff] %v1386
                  %v1388 = vld [vmem:[%s1382 + $0x10] sm:$0xff]
                  %1389 = vst [vmem:[%s1383 + $0x10] sm:$0xff] %v1388
                  %v1390 = vld [vmem:[%s1382 + $0x18] sm:$0xff]
                  %1391 = vst [vmem:[%s1383 + $0x18] sm:$0xff] %v1390
                  %v1392 = vld [vmem:[%s1382 + $0x20] sm:$0xff]
                  %1393 = vst [vmem:[%s1383 + $0x20] sm:$0xff] %v1392
                  %v1394 = vld [vmem:[%s1382 + $0x28] sm:$0xff]
                  %1395 = vst [vmem:[%s1383 + $0x28] sm:$0xff] %v1394
                  %v1396 = vld [vmem:[%s1382 + $0x30] sm:$0xff]
                  %1397 = vst [vmem:[%s1383 + $0x30] sm:$0xff] %v1396
                  %v1398 = vld [vmem:[%s1382 + $0x38] sm:$0xff]
                  %1399 = vst [vmem:[%s1383 + $0x38] sm:$0xff] %v1398
                  %v1400 = vld [vmem:[%s1382 + $0x40] sm:$0xff]
                  %1401 = vst [vmem:[%s1383 + $0x40] sm:$0xff] %v1400
                  %v1402 = vld [vmem:[%s1382 + $0x48] sm:$0xff]
                  %1403 = vst [vmem:[%s1383 + $0x48] sm:$0xff] %v1402
                  %v1404 = vld [vmem:[%s1382 + $0x50] sm:$0xff]
                  %1405 = vst [vmem:[%s1383 + $0x50] sm:$0xff] %v1404
                  %v1406 = vld [vmem:[%s1382 + $0x58] sm:$0xff]
                  %1407 = vst [vmem:[%s1383 + $0x58] sm:$0xff] %v1406
                  %v1408 = vld [vmem:[%s1382 + $0x60] sm:$0xff]
                  %1409 = vst [vmem:[%s1383 + $0x60] sm:$0xff] %v1408
                  %s1410 = sadd.s32 1, %s1381
                  %p1411 = scmp.ge.s32.totalorder %s1410, %s1373
                  %s1412 = scalar_select %p1411, 0, %s1410
                  %s1413 = smul.u32 %s1412, 104
                  %s1414 = smul.u32 %s1412, 104
                  %s1415 = scalar_lea.vmem %s1281, %s1413 [#allocation11]
                  %s1416 = scalar_lea.vmem %s1292, %s1414
                $region115: #{network_forward.1} parent=109 // loop_footer
                  %s1378 = sadd.s32 %s1376, 1
                $region116: #{network_forward.1} parent=109 // loop_footer_branch
                  %1375 = sbr.rel target = $region112
                $region117: #{network_forward.1} parent=109 // loop_exit
                  _
                %s1417 = sdiv.u32.pop %s1288, 13
                %s1418 = srem.u32.pop %s1288, 13
                %s1419 = smul.u32 %s1417, 13
                %s1420 = smul.u32 8, %s1419
                %s1421 = scalar_lea.vmem %s1281, %s1420 [#allocation11]
                %s1422 = smul.u32 8, %s1419
                %s1423 = scalar_lea.vmem %s1292, %s1422
                // While loop
                $region118: #{network_forward.1} parent=109 // loop_pre_header
                  _
                $region119: #{network_forward.1} parent=109 // loop_header
                  %s1425 = sphi 0, %s1427
                  %p1426 = scmp.ge.s32.totalorder %s1425, %s1418
                  %s1430 = sphi 0, %s1437
                  %s1431 = sphi %s1421, %s1440
                  %s1432 = sphi %s1423, %s1441
                $region120: #{network_forward.1} parent=109 // loop_header_branch
                  %1429 = sbr.rel (%p1426) target = $region124
                $region121: #{network_forward.1} parent=109 // loop_body
                  %v1433 = vld [vmem:[%s1431] sm:$0xff]
                  %1434 = vst [vmem:[%s1432] sm:$0xff] %v1433
                  %s1435 = sadd.s32 1, %s1430
                  %p1436 = scmp.ge.s32.totalorder %s1435, %s1418
                  %s1437 = scalar_select %p1436, 0, %s1435
                  %s1438 = smul.u32 %s1437, 8
                  %s1439 = smul.u32 %s1437, 8
                  %s1440 = scalar_lea.vmem %s1421, %s1438 [#allocation11]
                  %s1441 = scalar_lea.vmem %s1423, %s1439
                $region122: #{network_forward.1} parent=109 // loop_footer
                  %s1427 = sadd.s32 %s1425, 1
                $region123: #{network_forward.1} parent=109 // loop_footer_branch
                  %1424 = sbr.rel target = $region119
                $region124: #{network_forward.1} parent=109 // loop_exit
                  _
              $region110: #{network_forward.1} parent=87 // pred_fallthru
                _
              // Predicated region
              $region125: #{network_forward.1} parent=87 // pred_check
                _
              $region126: #{network_forward.1} parent=87 // pred_check_branch
                %1443 = sbr.rel target = $region128
              $region127: #{network_forward.1} parent=87 // pred_region
                _
              $region128: #{network_forward.1} parent=87 // pred_fallthru
                _
            $region88: #{network_forward.1} parent=83 // pred_fallthru
              _
            // Predicated region
            $region89: #{network_forward.1} parent=83 // pred_check
              _
            $region90: #{network_forward.1} parent=83 // pred_check_branch
              %1299 = sbr.rel target = $region92
            $region91: #{network_forward.1} parent=83 // pred_region
              %s1301 = ssub.s32 256, 1
              %s1302 = sdiv.u32.pop %s1288, 13
              %s1303 = srem.u32.pop %s1288, 13
              // While loop
              $region93: #{network_forward.1} parent=91 // loop_pre_header
                _
              $region94: #{network_forward.1} parent=91 // loop_header
                %s1305 = sphi 0, %s1307
                %p1306 = scmp.ge.s32.totalorder %s1305, %s1302
                %s1310 = sphi 0, %s1341
                %s1311 = sphi %s1281, %s1344
                %s1312 = sphi %s1292, %s1345
              $region95: #{network_forward.1} parent=91 // loop_header_branch
                %1309 = sbr.rel (%p1306) target = $region99
              $region96: #{network_forward.1} parent=91 // loop_body
                %v1313 = vld [vmem:[%s1311] sm:%s1301]
                %1314 = vst [vmem:[%s1312] sm:%s1301] %v1313
                %v1315 = vld [vmem:[%s1311 + $0x8] sm:%s1301]
                %1316 = vst [vmem:[%s1312 + $0x8] sm:%s1301] %v1315
                %v1317 = vld [vmem:[%s1311 + $0x10] sm:%s1301]
                %1318 = vst [vmem:[%s1312 + $0x10] sm:%s1301] %v1317
                %v1319 = vld [vmem:[%s1311 + $0x18] sm:%s1301]
                %1320 = vst [vmem:[%s1312 + $0x18] sm:%s1301] %v1319
                %v1321 = vld [vmem:[%s1311 + $0x20] sm:%s1301]
                %1322 = vst [vmem:[%s1312 + $0x20] sm:%s1301] %v1321
                %v1323 = vld [vmem:[%s1311 + $0x28] sm:%s1301]
                %1324 = vst [vmem:[%s1312 + $0x28] sm:%s1301] %v1323
                %v1325 = vld [vmem:[%s1311 + $0x30] sm:%s1301]
                %1326 = vst [vmem:[%s1312 + $0x30] sm:%s1301] %v1325
                %v1327 = vld [vmem:[%s1311 + $0x38] sm:%s1301]
                %1328 = vst [vmem:[%s1312 + $0x38] sm:%s1301] %v1327
                %v1329 = vld [vmem:[%s1311 + $0x40] sm:%s1301]
                %1330 = vst [vmem:[%s1312 + $0x40] sm:%s1301] %v1329
                %v1331 = vld [vmem:[%s1311 + $0x48] sm:%s1301]
                %1332 = vst [vmem:[%s1312 + $0x48] sm:%s1301] %v1331
                %v1333 = vld [vmem:[%s1311 + $0x50] sm:%s1301]
                %1334 = vst [vmem:[%s1312 + $0x50] sm:%s1301] %v1333
                %v1335 = vld [vmem:[%s1311 + $0x58] sm:%s1301]
                %1336 = vst [vmem:[%s1312 + $0x58] sm:%s1301] %v1335
                %v1337 = vld [vmem:[%s1311 + $0x60] sm:%s1301]
                %1338 = vst [vmem:[%s1312 + $0x60] sm:%s1301] %v1337
                %s1339 = sadd.s32 1, %s1310
                %p1340 = scmp.ge.s32.totalorder %s1339, %s1302
                %s1341 = scalar_select %p1340, 0, %s1339
                %s1342 = smul.u32 %s1341, 104
                %s1343 = smul.u32 %s1341, 104
                %s1344 = scalar_lea.vmem %s1281, %s1342 [#allocation11]
                %s1345 = scalar_lea.vmem %s1292, %s1343
              $region97: #{network_forward.1} parent=91 // loop_footer
                %s1307 = sadd.s32 %s1305, 1
              $region98: #{network_forward.1} parent=91 // loop_footer_branch
                %1304 = sbr.rel target = $region94
              $region99: #{network_forward.1} parent=91 // loop_exit
                _
              %s1346 = sdiv.u32.pop %s1288, 13
              %s1347 = srem.u32.pop %s1288, 13
              %s1348 = smul.u32 %s1346, 13
              %s1349 = smul.u32 8, %s1348
              %s1350 = scalar_lea.vmem %s1281, %s1349 [#allocation11]
              %s1351 = smul.u32 8, %s1348
              %s1352 = scalar_lea.vmem %s1292, %s1351
              // While loop
              $region100: #{network_forward.1} parent=91 // loop_pre_header
                _
              $region101: #{network_forward.1} parent=91 // loop_header
                %s1354 = sphi 0, %s1356
                %p1355 = scmp.ge.s32.totalorder %s1354, %s1347
                %s1359 = sphi 0, %s1366
                %s1360 = sphi %s1350, %s1369
                %s1361 = sphi %s1352, %s1370
              $region102: #{network_forward.1} parent=91 // loop_header_branch
                %1358 = sbr.rel (%p1355) target = $region106
              $region103: #{network_forward.1} parent=91 // loop_body
                %v1362 = vld [vmem:[%s1360] sm:%s1301]
                %1363 = vst [vmem:[%s1361] sm:%s1301] %v1362
                %s1364 = sadd.s32 1, %s1359
                %p1365 = scmp.ge.s32.totalorder %s1364, %s1347
                %s1366 = scalar_select %p1365, 0, %s1364
                %s1367 = smul.u32 %s1366, 8
                %s1368 = smul.u32 %s1366, 8
                %s1369 = scalar_lea.vmem %s1350, %s1367 [#allocation11]
                %s1370 = scalar_lea.vmem %s1352, %s1368
              $region104: #{network_forward.1} parent=91 // loop_footer
                %s1356 = sadd.s32 %s1354, 1
              $region105: #{network_forward.1} parent=91 // loop_footer_branch
                %1353 = sbr.rel target = $region101
              $region106: #{network_forward.1} parent=91 // loop_exit
                _
            $region92: #{network_forward.1} parent=83 // pred_fallthru
              _
          $region84: #{network_forward.1} parent=79 // pred_fallthru
            _
          %1444 = vnop
        $region80: #{network_forward.1} parent=55 // pred_fallthru
          _
      $region56: #{network_forward.1} parent=5 // pred_fallthru
        _
      %p1445 = scmp.le.s32.totalorder 2, %s20
      // Predicated region
      $region129: #{network_forward.1} parent=5 // pred_check
        %p1446 = pneg %p1445
      $region130: #{network_forward.1} parent=5 // pred_check_branch
        %1448 = sbr.rel (%p1446) target = $region132
      $region131: #{network_forward.1} parent=5 // pred_region
        %s1449 = ssub.s32 %s20, 2
        // Predicated region
        $region133: #{network_forward.1} parent=131 // pred_check
          %p1450 = pneg %p243
        $region134: #{network_forward.1} parent=131 // pred_check_branch
          %1452 = sbr.rel (%p1450) target = $region136
        $region135: #{network_forward.1} parent=131 // pred_region
          %s1453 = sand.u32 %s228, 1
          %s1454 = sand.u32 %s228, 1
          %s1455 = smul.addr %s1454, 104
          %s1456 = scalar_lea.vmem [#allocation11], %s1455
        $region136: #{network_forward.1} parent=131 // pred_fallthru
          _
      $region132: #{network_forward.1} parent=5 // pred_fallthru
        _
    $region6: #{network_forward.1} parent=1 // loop_footer
      %s24 = sadd.s32 1, %s20
    $region7: #{network_forward.1} parent=1 // loop_footer_branch
      %19 = sbr.rel target = $region3
    $region8: #{network_forward.1} parent=1 // loop_exit
      _
    %1457 = vsyncpa [#allocation4], 1
    %s1458 = scalar_lea.sflag [#allocation4], 1
    %1459 = vsyncpa %s1458, 1
    %1460 = vsyncpa [#allocation6], 1
    %1461 = vsyncpa [#allocation9], 1

</llo_original>
